<compile_context>
chip_gen: v7x
topology: tpu7x:2x2x1
jax: 0.10.0
libtpu: 0.0.40
codegen_flags: <defaults>
</compile_context>

<pallas_src>
import math

import jax
import jax.numpy as jnp
from jax.experimental import pallas as pl
from jax.experimental.pallas import tpu as pltpu

LN_EPS = 1e-5


def _layernorm(x, gamma, beta):
    mu = jnp.mean(x, axis=-1, keepdims=True)
    var = jnp.mean((x - mu) ** 2, axis=-1, keepdims=True)
    return (x - mu) * jax.lax.rsqrt(var + LN_EPS) * gamma + beta


def mixed_pos_encoder_kernel(
    x_ref,        # (TB*S, D)  f32
    pos_ref,      # (S, D)     f32
    mask_ref,     # (TB, 1, S) int32 ; 1 = keep, 0 = masked
    wqkvo_ref,    # (4, D, D)  compute dtype   [wq, wk, wv, wo]
    w1_ref,       # (D, F)     compute dtype
    w2_ref,       # (F, D)     compute dtype
    vecs_ref,     # (11, D)    f32  [bq,bk,bv,bo,b2,g1,be1,g2,be2,gf,bef]
    b1_ref,       # (1, F)     f32
    out_ref,      # (TB*S, D)  f32
):
    tb, _, seq = mask_ref.shape
    rows, dim = x_ref.shape          # rows == tb * seq
    cdt = w1_ref.dtype               # MXU operand dtype (f32 or bf16)

    vecs = vecs_ref[...].astype(jnp.float32)
    bq, bk, bv = vecs[0:1], vecs[1:2], vecs[2:3]
    bo, b2 = vecs[3:4], vecs[4:5]
    g1, be1 = vecs[5:6], vecs[6:7]
    g2, be2 = vecs[7:8], vecs[8:9]
    gf, bef = vecs[9:10], vecs[10:11]

    # ---- positional mix-in (learned prefix ++ sinusoidal, pre-sliced to S) ----
    x = x_ref[...].astype(jnp.float32)                       # (rows, D)
    pos = pos_ref[...].astype(jnp.float32)                   # (S, D)
    x = (x.reshape(tb, seq, dim) + pos[None]).reshape(rows, dim)
    # TODO(synk): torch.nn.Dropout in train mode not reproduced; eval-mode
    # semantics (identity) are used here.

    # ---- sublayer 1: x + SelfAttn(LayerNorm(x), mask) ----
    h = _layernorm(x, g1, be1).astype(cdt)                   # (rows, D)
    q = jnp.dot(h, wqkvo_ref[0], preferred_element_type=jnp.float32) + bq
    k = jnp.dot(h, wqkvo_ref[1], preferred_element_type=jnp.float32) + bk
    v = jnp.dot(h, wqkvo_ref[2], preferred_element_type=jnp.float32) + bv

    # Fold the 1/sqrt(d) scale into q (a (rows, D) VPU mul instead of (S, S)).
    q = q * jax.lax.rsqrt(jnp.float32(dim))

    q3 = q.reshape(tb, seq, dim).astype(cdt)
    k3 = k.reshape(tb, seq, dim).astype(cdt)
    v3 = v.reshape(tb, seq, dim).astype(cdt)

    # Batched QK^T with contraction on d (no explicit k transpose).
    scores = jnp.einsum("bqd,bkd->bqk", q3, k3,
                        preferred_element_type=jnp.float32)  # (tb, S, S) f32
    mask = mask_ref[...]                                     # (tb, 1, S)
    scores = jnp.where(mask == 0, jnp.float32(-1e9), scores)
    scores = scores - jnp.max(scores, axis=-1, keepdims=True)
    p = jnp.exp(scores)
    p = p * pl.reciprocal(jnp.sum(p, axis=-1, keepdims=True), approx=True)

    attn = jnp.einsum("bqk,bkd->bqd", p.astype(cdt), v3,
                      preferred_element_type=jnp.float32)    # (tb, S, D) f32
    attn = attn.reshape(rows, dim)
    attn = jnp.dot(attn.astype(cdt), wqkvo_ref[3],
                   preferred_element_type=jnp.float32) + bo
    x = x + attn

    # ---- sublayer 2: x + FFN(LayerNorm(x)) ----
    h = _layernorm(x, g2, be2).astype(cdt)
    ff = jnp.dot(h, w1_ref[...], preferred_element_type=jnp.float32) + b1_ref[...]
    ff = jnp.maximum(ff, 0.0)
    ff = jnp.dot(ff.astype(cdt), w2_ref[...],
                 preferred_element_type=jnp.float32) + b2
    x = x + ff

    # ---- final LayerNorm ----
    out_ref[...] = _layernorm(x, gf, bef).astype(out_ref.dtype)


def _choose_block_batch(B, S, target_rows=128):
    """Largest TB dividing B with TB*S sublane-aligned, keeping >=2 grid steps
    when possible (v7x megacore) and TB*S around `target_rows` MXU rows."""
    cands = [tb for tb in range(1, B + 1)
             if B % tb == 0 and ((tb * S) % 8 == 0 or tb == B)]
    pref = [tb for tb in cands if B // tb >= 2 and tb * S <= max(target_rows, S)]
    if pref:
        return max(pref)
    ok = [tb for tb in cands if tb * S <= max(target_rows, S)]
    return max(ok) if ok else min(cands)


def mixed_positional_encoder(x, mask, params, *, compute_dtype=jnp.float32,
                             block_batch=None):
    """x: (B, S, D) f32, mask: (B, 1, S) int32 (1 = keep)."""
    B, S, D = x.shape
    tb = _choose_block_batch(B, S) if block_batch is None else block_batch
    assert B % tb == 0
    rows = tb * S

    pos = params["pos_embed"][:S]                            # (S, D), glue slice

    cdt = compute_dtype
    wqkvo = jnp.stack([params["wq"], params["wk"],
                       params["wv"], params["wo"]]).astype(cdt)   # (4, D, D)
    w1 = params["w1"].astype(cdt)                                  # (D, F)
    w2 = params["w2"].astype(cdt)                                  # (F, D)
    # Pack all (1, D) vectors into one input: one DMA instead of eleven.
    vecs = jnp.concatenate([
        params["bq"], params["bk"], params["bv"], params["bo"], params["b2"],
        params["g1"], params["be1"], params["g2"], params["be2"],
        params["gf"], params["bef"]], axis=0).astype(jnp.float32)  # (11, D)
    b1 = params["b1"].astype(jnp.float32)                          # (1, F)

    x2 = x.reshape(B * S, D)                                 # free row-major reshape

    def const_spec(arr):
        nd = arr.ndim
        return pl.BlockSpec(arr.shape, lambda b, _n=nd: (0,) * _n)

    in_specs = [
        pl.BlockSpec((rows, D), lambda b: (b, 0)),           # x rows (per-step tile)
        const_spec(pos),                                     # pos (shared)
        pl.BlockSpec((tb, 1, S), lambda b: (b, 0, 0)),       # mask (per-step tile)
        const_spec(wqkvo), const_spec(w1), const_spec(w2),
        const_spec(vecs), const_spec(b1),
    ]

    grid_spec = pltpu.PrefetchScalarGridSpec(
        num_scalar_prefetch=0,
        grid=(B // tb,),
        in_specs=in_specs,
        out_specs=pl.BlockSpec((rows, D), lambda b: (b, 0)),
    )

    out = pl.pallas_call(
        mixed_pos_encoder_kernel,
        out_shape=jax.ShapeDtypeStruct((B * S, D), jnp.float32),
        grid_spec=grid_spec,
        compiler_params=pltpu.CompilerParams(dimension_semantics=("parallel",)),
    )(x2, pos, mask, wqkvo, w1, w2, vecs, b1)
    return out.reshape(B, S, D)


# ---------------------------- pure-JAX reference ----------------------------
def reference(x, mask, params):
    pos = params["pos_embed"][: x.shape[1]]
    h = x + pos[None]

    def ln(z, g, b):
        mu = jnp.mean(z, axis=-1, keepdims=True)
        var = jnp.mean((z - mu) ** 2, axis=-1, keepdims=True)
        return (z - mu) * jax.lax.rsqrt(var + LN_EPS) * g + b

    d = x.shape[-1]
    n1 = ln(h, params["g1"], params["be1"])
    q = n1 @ params["wq"] + params["bq"]
    k = n1 @ params["wk"] + params["bk"]
    v = n1 @ params["wv"] + params["bv"]
    scores = jnp.einsum("bqd,bkd->bqk", q, k) / jnp.sqrt(jnp.float32(d))
    scores = jnp.where(mask == 0, -1e9, scores)
    p = jax.nn.softmax(scores, axis=-1)
    attn = jnp.einsum("bqk,bkd->bqd", p, v) @ params["wo"] + params["bo"]
    h = h + attn

    n2 = ln(h, params["g2"], params["be2"])
    ff = jnp.maximum(n2 @ params["w1"] + params["b1"], 0.0) @ params["w2"] + params["b2"]
    h = h + ff
    return ln(h, params["gf"], params["bef"])


# ------------------------------- init helpers -------------------------------
def make_params(key, learned_positions, embed_dim, ffn_dim, max_len):
    ks = jax.random.split(key, 16)

    # learned positional encodings: kaiming_uniform(a=sqrt(5)) -> U(-1/sqrt(D), 1/sqrt(D))
    bound = 1.0 / math.sqrt(embed_dim)
    learned = jax.random.uniform(
        ks[0], (learned_positions, embed_dim), jnp.float32, -bound, bound)

    # fixed sinusoidal table (Vaswani et al.), exactly as in the torch module
    position = jnp.arange(0, max_len, dtype=jnp.float32)[:, None]
    div_term = jnp.exp(
        jnp.arange(0, embed_dim, 2, dtype=jnp.float32)
        * -(math.log(10000.0) / embed_dim))
    pe = jnp.zeros((max_len, embed_dim), jnp.float32)
    pe = pe.at[:, 0::2].set(jnp.sin(position * div_term))
    pe = pe.at[:, 1::2].set(jnp.cos(position * div_term))

    pos_embed = jnp.concatenate([learned, pe], axis=0)   # (P + max_len, D)

    def lin(k, fan_in, fan_out):
        b = 1.0 / math.sqrt(fan_in)
        return jax.random.uniform(k, (fan_in, fan_out), jnp.float32, -b, b)

    D, Fh = embed_dim, ffn_dim
    params = dict(
        pos_embed=pos_embed,
        wq=lin(ks[1], D, D), bq=jnp.zeros((1, D), jnp.float32),
        wk=lin(ks[2], D, D), bk=jnp.zeros((1, D), jnp.float32),
        wv=lin(ks[3], D, D), bv=jnp.zeros((1, D), jnp.float32),
        wo=lin(ks[4], D, D), bo=jnp.zeros((1, D), jnp.float32),
        w1=lin(ks[5], D, Fh), b1=jnp.zeros((1, Fh), jnp.float32),
        w2=lin(ks[6], Fh, D), b2=jnp.zeros((1, D), jnp.float32),
        g1=jnp.ones((1, D), jnp.float32), be1=jnp.zeros((1, D), jnp.float32),
        g2=jnp.ones((1, D), jnp.float32), be2=jnp.zeros((1, D), jnp.float32),
        gf=jnp.ones((1, D), jnp.float32), bef=jnp.zeros((1, D), jnp.float32),
    )
    return params


if __name__ == "__main__":
    B, S, D = 4, 8, 32
    LEARNED_POS, MAX_LEN, FFN = 3, 16, 64

    key = jax.random.PRNGKey(0)
    k_x, k_p = jax.random.split(key)

    x = jax.random.normal(k_x, (B, S, D), jnp.float32)
    # mask: 1 = attend, 0 = masked out (last two positions padded)
    mask = jnp.ones((B, 1, S), jnp.int32)
    mask = mask.at[:, :, S - 2:].set(0)

    params = make_params(k_p, LEARNED_POS, D, FFN, MAX_LEN)
    ref = reference(x, mask, params)

    # f32 MXU-operand path (v5e-friendly). Tolerance is slightly looser than
    # pure-f32 because the softmax uses the EUP approximate reciprocal.
    out = jax.block_until_ready(mixed_positional_encoder(x, mask, params))
    assert out.shape == (B, S, D)
    assert jnp.allclose(out, ref, atol=2e-3, rtol=2e-3), (
        float(jnp.max(jnp.abs(out - ref))))

    # bf16 MXU-operand path (v6e/v7x): weights + matmul inputs in bf16, f32
    # accumulation and f32 LayerNorm/softmax/residuals; loose tolerance.
    out_bf16 = jax.block_until_ready(
        mixed_positional_encoder(x, mask, params, compute_dtype=jnp.bfloat16))
    assert out_bf16.shape == (B, S, D)
    assert jnp.allclose(out_bf16, ref, atol=1e-1, rtol=1e-1), (
        float(jnp.max(jnp.abs(out_bf16 - ref))))

    print("KERNEL_OK")
</pallas_src>

<mosaic_0001>
module attributes {stable_mosaic.version = 11 : i64} {
  func.func @mixed_pos_encoder_kernel(%arg0: i32, %arg1: memref<16x32xf32, #tpu.memory_space<vmem>>, %arg2: memref<8x32xf32, #tpu.memory_space<vmem>>, %arg3: memref<2x1x8xi32, #tpu.memory_space<vmem>>, %arg4: memref<4x32x32xf32, #tpu.memory_space<vmem>>, %arg5: memref<32x64xf32, #tpu.memory_space<vmem>>, %arg6: memref<64x32xf32, #tpu.memory_space<vmem>>, %arg7: memref<11x32xf32, #tpu.memory_space<vmem>>, %arg8: memref<1x64xf32, #tpu.memory_space<vmem>>, %arg9: memref<16x32xf32, #tpu.memory_space<vmem>>) attributes {dimension_semantics = [#tpu.dimension_semantics<parallel>], iteration_bounds = array<i64: 2>, scalar_prefetch = 0 : i64, scratch_operands = 0 : i64, tpu.core_type = #tpu.core_type<tc>, window_params = [{transform_indices = @transform_0, window_bounds = array<i64: 16, 32>}, {pipeline_mode = #tpu.pipeline_mode<synchronous>, transform_indices = @transform_1, window_bounds = array<i64: 8, 32>}, {transform_indices = @transform_2, window_bounds = array<i64: 2, 1, 8>}, {pipeline_mode = #tpu.pipeline_mode<synchronous>, transform_indices = @transform_3, window_bounds = array<i64: 4, 32, 32>}, {pipeline_mode = #tpu.pipeline_mode<synchronous>, transform_indices = @transform_4, window_bounds = array<i64: 32, 64>}, {pipeline_mode = #tpu.pipeline_mode<synchronous>, transform_indices = @transform_5, window_bounds = array<i64: 64, 32>}, {pipeline_mode = #tpu.pipeline_mode<synchronous>, transform_indices = @transform_6, window_bounds = array<i64: 11, 32>}, {pipeline_mode = #tpu.pipeline_mode<synchronous>, transform_indices = @transform_7, window_bounds = array<i64: 1, 64>}, {transform_indices = @transform_8, window_bounds = array<i64: 16, 32>}]} {
    %c0 = arith.constant 0 : index
    %c0_0 = arith.constant 0 : index
    %0 = vector.load %arg7[%c0, %c0_0] : memref<11x32xf32, #tpu.memory_space<vmem>>, vector<11x32xf32>
    %1 = vector.extract_strided_slice %0 {offsets = [0, 0], sizes = [1, 32], strides = [1, 1]} : vector<11x32xf32> to vector<1x32xf32>
    %2 = vector.extract_strided_slice %0 {offsets = [1, 0], sizes = [1, 32], strides = [1, 1]} : vector<11x32xf32> to vector<1x32xf32>
    %3 = vector.extract_strided_slice %0 {offsets = [2, 0], sizes = [1, 32], strides = [1, 1]} : vector<11x32xf32> to vector<1x32xf32>
    %4 = vector.extract_strided_slice %0 {offsets = [3, 0], sizes = [1, 32], strides = [1, 1]} : vector<11x32xf32> to vector<1x32xf32>
    %5 = vector.extract_strided_slice %0 {offsets = [4, 0], sizes = [1, 32], strides = [1, 1]} : vector<11x32xf32> to vector<1x32xf32>
    %6 = vector.extract_strided_slice %0 {offsets = [5, 0], sizes = [1, 32], strides = [1, 1]} : vector<11x32xf32> to vector<1x32xf32>
    %7 = vector.extract_strided_slice %0 {offsets = [6, 0], sizes = [1, 32], strides = [1, 1]} : vector<11x32xf32> to vector<1x32xf32>
    %8 = vector.extract_strided_slice %0 {offsets = [7, 0], sizes = [1, 32], strides = [1, 1]} : vector<11x32xf32> to vector<1x32xf32>
    %9 = vector.extract_strided_slice %0 {offsets = [8, 0], sizes = [1, 32], strides = [1, 1]} : vector<11x32xf32> to vector<1x32xf32>
    %10 = vector.extract_strided_slice %0 {offsets = [9, 0], sizes = [1, 32], strides = [1, 1]} : vector<11x32xf32> to vector<1x32xf32>
    %11 = vector.extract_strided_slice %0 {offsets = [10, 0], sizes = [1, 32], strides = [1, 1]} : vector<11x32xf32> to vector<1x32xf32>
    %c0_1 = arith.constant 0 : index
    %c0_2 = arith.constant 0 : index
    %12 = vector.load %arg1[%c0_1, %c0_2] : memref<16x32xf32, #tpu.memory_space<vmem>>, vector<16x32xf32>
    %c0_3 = arith.constant 0 : index
    %c0_4 = arith.constant 0 : index
    %13 = vector.load %arg2[%c0_3, %c0_4] : memref<8x32xf32, #tpu.memory_space<vmem>>, vector<8x32xf32>
    %14 = vector.shape_cast %12 : vector<16x32xf32> to vector<2x8x32xf32>
    %15 = vector.shape_cast %13 : vector<8x32xf32> to vector<1x8x32xf32>
    %16 = vector.broadcast %15 : vector<1x8x32xf32> to vector<2x8x32xf32>
    %17 = arith.addf %14, %16 : vector<2x8x32xf32>
    %18 = vector.shape_cast %17 : vector<2x8x32xf32> to vector<16x32xf32>
    %cst = arith.constant dense<0.000000e+00> : vector<16xf32>
    %19 = vector.multi_reduction <add>, %18, %cst [1] : vector<16x32xf32> to vector<16xf32>
    %20 = vector.shape_cast %19 : vector<16xf32> to vector<16x1xf32>
    %cst_5 = arith.constant 3.200000e+01 : f32
    %21 = vector.broadcast %cst_5 : f32 to vector<16x1xf32>
    %22 = arith.divf %20, %21 : vector<16x1xf32>
    %23 = vector.broadcast %22 : vector<16x1xf32> to vector<16x32xf32>
    %24 = arith.subf %18, %23 : vector<16x32xf32>
    %25 = arith.mulf %24, %24 : vector<16x32xf32>
    %cst_6 = arith.constant dense<0.000000e+00> : vector<16xf32>
    %26 = vector.multi_reduction <add>, %25, %cst_6 [1] : vector<16x32xf32> to vector<16xf32>
    %27 = vector.shape_cast %26 : vector<16xf32> to vector<16x1xf32>
    %cst_7 = arith.constant 3.200000e+01 : f32
    %28 = vector.broadcast %cst_7 : f32 to vector<16x1xf32>
    %29 = arith.divf %27, %28 : vector<16x1xf32>
    %30 = vector.broadcast %22 : vector<16x1xf32> to vector<16x32xf32>
    %31 = arith.subf %18, %30 : vector<16x32xf32>
    %cst_8 = arith.constant 9.99999974E-6 : f32
    %32 = vector.broadcast %cst_8 : f32 to vector<16x1xf32>
    %33 = arith.addf %29, %32 : vector<16x1xf32>
    %34 = math.rsqrt %33 : vector<16x1xf32>
    %35 = vector.broadcast %34 : vector<16x1xf32> to vector<16x32xf32>
    %36 = arith.mulf %31, %35 : vector<16x32xf32>
    %37 = vector.broadcast %6 : vector<1x32xf32> to vector<16x32xf32>
    %38 = arith.mulf %36, %37 : vector<16x32xf32>
    %39 = vector.broadcast %7 : vector<1x32xf32> to vector<16x32xf32>
    %40 = arith.addf %38, %39 : vector<16x32xf32>
    %c0_9 = arith.constant 0 : index
    %c0_10 = arith.constant 0 : index
    %c0_11 = arith.constant 0 : index
    %41 = vector.load %arg4[%c0_9, %c0_10, %c0_11] : memref<4x32x32xf32, #tpu.memory_space<vmem>>, vector<1x32x32xf32>
    %42 = vector.shape_cast %41 : vector<1x32x32xf32> to vector<32x32xf32>
    %cst_12 = arith.constant dense<0.000000e+00> : vector<16x32xf32>
    %43 = tpu.matmul %40, %42, %cst_12 {dimension_numbers = #tpu.dot_dimension_numbers<[1], [0], [0], [1], [0, 0, 1, 1], [], []>} : vector<16x32xf32>, vector<32x32xf32>, vector<16x32xf32> -> vector<16x32xf32>
    %44 = vector.broadcast %1 : vector<1x32xf32> to vector<16x32xf32>
    %45 = arith.addf %43, %44 : vector<16x32xf32>
    %c1 = arith.constant 1 : index
    %c0_13 = arith.constant 0 : index
    %c0_14 = arith.constant 0 : index
    %46 = vector.load %arg4[%c1, %c0_13, %c0_14] : memref<4x32x32xf32, #tpu.memory_space<vmem>>, vector<1x32x32xf32>
    %47 = vector.shape_cast %46 : vector<1x32x32xf32> to vector<32x32xf32>
    %cst_15 = arith.constant dense<0.000000e+00> : vector<16x32xf32>
    %48 = tpu.matmul %40, %47, %cst_15 {dimension_numbers = #tpu.dot_dimension_numbers<[1], [0], [0], [1], [0, 0, 1, 1], [], []>} : vector<16x32xf32>, vector<32x32xf32>, vector<16x32xf32> -> vector<16x32xf32>
    %49 = vector.broadcast %2 : vector<1x32xf32> to vector<16x32xf32>
    %50 = arith.addf %48, %49 : vector<16x32xf32>
    %c2 = arith.constant 2 : index
    %c0_16 = arith.constant 0 : index
    %c0_17 = arith.constant 0 : index
    %51 = vector.load %arg4[%c2, %c0_16, %c0_17] : memref<4x32x32xf32, #tpu.memory_space<vmem>>, vector<1x32x32xf32>
    %52 = vector.shape_cast %51 : vector<1x32x32xf32> to vector<32x32xf32>
    %cst_18 = arith.constant dense<0.000000e+00> : vector<16x32xf32>
    %53 = tpu.matmul %40, %52, %cst_18 {dimension_numbers = #tpu.dot_dimension_numbers<[1], [0], [0], [1], [0, 0, 1, 1], [], []>} : vector<16x32xf32>, vector<32x32xf32>, vector<16x32xf32> -> vector<16x32xf32>
    %54 = vector.broadcast %3 : vector<1x32xf32> to vector<16x32xf32>
    %55 = arith.addf %53, %54 : vector<16x32xf32>
    %cst_19 = arith.constant 3.200000e+01 : f32
    %56 = math.rsqrt %cst_19 : f32
    %57 = vector.broadcast %56 : f32 to vector<16x32xf32>
    %58 = arith.mulf %45, %57 : vector<16x32xf32>
    %59 = vector.shape_cast %58 : vector<16x32xf32> to vector<2x8x32xf32>
    %60 = vector.shape_cast %50 : vector<16x32xf32> to vector<2x8x32xf32>
    %61 = vector.shape_cast %55 : vector<16x32xf32> to vector<2x8x32xf32>
    "tpu.trace_start"() <{level = 10 : i32, message = "bqd,bkd->bqk"}> : () -> ()
    %cst_20 = arith.constant dense<0.000000e+00> : vector<2x8x8xf32>
    %62 = tpu.matmul %59, %60, %cst_20 {dimension_numbers = #tpu.dot_dimension_numbers<[2], [2], [1], [1], [0, 0, 0, 1, 1, 1], [0], [0]>} : vector<2x8x32xf32>, vector<2x8x32xf32>, vector<2x8x8xf32> -> vector<2x8x8xf32>
    "tpu.trace_stop"() : () -> ()
    %c0_21 = arith.constant 0 : index
    %c0_22 = arith.constant 0 : index
    %c0_23 = arith.constant 0 : index
    %63 = vector.load %arg3[%c0_21, %c0_22, %c0_23] : memref<2x1x8xi32, #tpu.memory_space<vmem>>, vector<2x1x8xi32>
    %c0_i32 = arith.constant 0 : i32
    %64 = vector.broadcast %c0_i32 : i32 to vector<2x1x8xi32>
    %65 = arith.cmpi eq, %63, %64 : vector<2x1x8xi32>
    %cst_24 = arith.constant -1.000000e+09 : f32
    %66 = vector.shape_cast %65 : vector<2x1x8xi1> to vector<2x1x8xi1>
    %67 = vector.broadcast %66 : vector<2x1x8xi1> to vector<2x8x8xi1>
    %68 = vector.broadcast %cst_24 : f32 to vector<2x8x8xf32>
    %69 = arith.select %67, %68, %62 : vector<2x8x8xi1>, vector<2x8x8xf32>
    %cst_25 = arith.constant dense<0xFF800000> : vector<2x8xf32>
    %70 = vector.multi_reduction <maximumf>, %69, %cst_25 [2] : vector<2x8x8xf32> to vector<2x8xf32>
    %71 = vector.shape_cast %70 : vector<2x8xf32> to vector<2x8x1xf32>
    %72 = vector.broadcast %71 : vector<2x8x1xf32> to vector<2x8x8xf32>
    %73 = arith.subf %69, %72 : vector<2x8x8xf32>
    %74 = math.exp %73 : vector<2x8x8xf32>
    %cst_26 = arith.constant dense<0.000000e+00> : vector<2x8xf32>
    %75 = vector.multi_reduction <add>, %74, %cst_26 [2] : vector<2x8x8xf32> to vector<2x8xf32>
    %76 = vector.shape_cast %75 : vector<2x8xf32> to vector<2x8x1xf32>
    %77 = tpu.reciprocal %76 {approx = true} : vector<2x8x1xf32> -> vector<2x8x1xf32>
    %78 = vector.broadcast %77 : vector<2x8x1xf32> to vector<2x8x8xf32>
    %79 = arith.mulf %74, %78 : vector<2x8x8xf32>
    "tpu.trace_start"() <{level = 10 : i32, message = "bqk,bkd->bqd"}> : () -> ()
    %cst_27 = arith.constant dense<0.000000e+00> : vector<2x8x32xf32>
    %80 = tpu.matmul %79, %61, %cst_27 {dimension_numbers = #tpu.dot_dimension_numbers<[2], [1], [1], [2], [0, 0, 0, 1, 1, 2], [0], [0]>} : vector<2x8x8xf32>, vector<2x8x32xf32>, vector<2x8x32xf32> -> vector<2x8x32xf32>
    "tpu.trace_stop"() : () -> ()
    %81 = vector.shape_cast %80 : vector<2x8x32xf32> to vector<16x32xf32>
    %c3 = arith.constant 3 : index
    %c0_28 = arith.constant 0 : index
    %c0_29 = arith.constant 0 : index
    %82 = vector.load %arg4[%c3, %c0_28, %c0_29] : memref<4x32x32xf32, #tpu.memory_space<vmem>>, vector<1x32x32xf32>
    %83 = vector.shape_cast %82 : vector<1x32x32xf32> to vector<32x32xf32>
    %cst_30 = arith.constant dense<0.000000e+00> : vector<16x32xf32>
    %84 = tpu.matmul %81, %83, %cst_30 {dimension_numbers = #tpu.dot_dimension_numbers<[1], [0], [0], [1], [0, 0, 1, 1], [], []>} : vector<16x32xf32>, vector<32x32xf32>, vector<16x32xf32> -> vector<16x32xf32>
    %85 = vector.broadcast %4 : vector<1x32xf32> to vector<16x32xf32>
    %86 = arith.addf %84, %85 : vector<16x32xf32>
    %87 = arith.addf %18, %86 : vector<16x32xf32>
    %cst_31 = arith.constant dense<0.000000e+00> : vector<16xf32>
    %88 = vector.multi_reduction <add>, %87, %cst_31 [1] : vector<16x32xf32> to vector<16xf32>
    %89 = vector.shape_cast %88 : vector<16xf32> to vector<16x1xf32>
    %cst_32 = arith.constant 3.200000e+01 : f32
    %90 = vector.broadcast %cst_32 : f32 to vector<16x1xf32>
    %91 = arith.divf %89, %90 : vector<16x1xf32>
    %92 = vector.broadcast %91 : vector<16x1xf32> to vector<16x32xf32>
    %93 = arith.subf %87, %92 : vector<16x32xf32>
    %94 = arith.mulf %93, %93 : vector<16x32xf32>
    %cst_33 = arith.constant dense<0.000000e+00> : vector<16xf32>
    %95 = vector.multi_reduction <add>, %94, %cst_33 [1] : vector<16x32xf32> to vector<16xf32>
    %96 = vector.shape_cast %95 : vector<16xf32> to vector<16x1xf32>
    %cst_34 = arith.constant 3.200000e+01 : f32
    %97 = vector.broadcast %cst_34 : f32 to vector<16x1xf32>
    %98 = arith.divf %96, %97 : vector<16x1xf32>
    %99 = vector.broadcast %91 : vector<16x1xf32> to vector<16x32xf32>
    %100 = arith.subf %87, %99 : vector<16x32xf32>
    %cst_35 = arith.constant 9.99999974E-6 : f32
    %101 = vector.broadcast %cst_35 : f32 to vector<16x1xf32>
    %102 = arith.addf %98, %101 : vector<16x1xf32>
    %103 = math.rsqrt %102 : vector<16x1xf32>
    %104 = vector.broadcast %103 : vector<16x1xf32> to vector<16x32xf32>
    %105 = arith.mulf %100, %104 : vector<16x32xf32>
    %106 = vector.broadcast %8 : vector<1x32xf32> to vector<16x32xf32>
    %107 = arith.mulf %105, %106 : vector<16x32xf32>
    %108 = vector.broadcast %9 : vector<1x32xf32> to vector<16x32xf32>
    %109 = arith.addf %107, %108 : vector<16x32xf32>
    %c0_36 = arith.constant 0 : index
    %c0_37 = arith.constant 0 : index
    %110 = vector.load %arg5[%c0_36, %c0_37] : memref<32x64xf32, #tpu.memory_space<vmem>>, vector<32x64xf32>
    %cst_38 = arith.constant dense<0.000000e+00> : vector<16x64xf32>
    %111 = tpu.matmul %109, %110, %cst_38 {dimension_numbers = #tpu.dot_dimension_numbers<[1], [0], [0], [1], [0, 0, 1, 1], [], []>} : vector<16x32xf32>, vector<32x64xf32>, vector<16x64xf32> -> vector<16x64xf32>
    %c0_39 = arith.constant 0 : index
    %c0_40 = arith.constant 0 : index
    %112 = vector.load %arg8[%c0_39, %c0_40] : memref<1x64xf32, #tpu.memory_space<vmem>>, vector<1x64xf32>
    %113 = vector.broadcast %112 : vector<1x64xf32> to vector<16x64xf32>
    %114 = arith.addf %111, %113 : vector<16x64xf32>
    %cst_41 = arith.constant 0.000000e+00 : f32
    %115 = vector.broadcast %cst_41 : f32 to vector<16x64xf32>
    %116 = arith.maximumf %114, %115 : vector<16x64xf32>
    %c0_42 = arith.constant 0 : index
    %c0_43 = arith.constant 0 : index
    %117 = vector.load %arg6[%c0_42, %c0_43] : memref<64x32xf32, #tpu.memory_space<vmem>>, vector<64x32xf32>
    %cst_44 = arith.constant dense<0.000000e+00> : vector<16x32xf32>
    %118 = tpu.matmul %116, %117, %cst_44 {dimension_numbers = #tpu.dot_dimension_numbers<[1], [0], [0], [1], [0, 0, 1, 1], [], []>} : vector<16x64xf32>, vector<64x32xf32>, vector<16x32xf32> -> vector<16x32xf32>
    %119 = vector.broadcast %5 : vector<1x32xf32> to vector<16x32xf32>
    %120 = arith.addf %118, %119 : vector<16x32xf32>
    %121 = arith.addf %87, %120 : vector<16x32xf32>
    %cst_45 = arith.constant dense<0.000000e+00> : vector<16xf32>
    %122 = vector.multi_reduction <add>, %121, %cst_45 [1] : vector<16x32xf32> to vector<16xf32>
    %123 = vector.shape_cast %122 : vector<16xf32> to vector<16x1xf32>
    %cst_46 = arith.constant 3.200000e+01 : f32
    %124 = vector.broadcast %cst_46 : f32 to vector<16x1xf32>
    %125 = arith.divf %123, %124 : vector<16x1xf32>
    %126 = vector.broadcast %125 : vector<16x1xf32> to vector<16x32xf32>
    %127 = arith.subf %121, %126 : vector<16x32xf32>
    %128 = arith.mulf %127, %127 : vector<16x32xf32>
    %cst_47 = arith.constant dense<0.000000e+00> : vector<16xf32>
    %129 = vector.multi_reduction <add>, %128, %cst_47 [1] : vector<16x32xf32> to vector<16xf32>
    %130 = vector.shape_cast %129 : vector<16xf32> to vector<16x1xf32>
    %cst_48 = arith.constant 3.200000e+01 : f32
    %131 = vector.broadcast %cst_48 : f32 to vector<16x1xf32>
    %132 = arith.divf %130, %131 : vector<16x1xf32>
    %133 = vector.broadcast %125 : vector<16x1xf32> to vector<16x32xf32>
    %134 = arith.subf %121, %133 : vector<16x32xf32>
    %cst_49 = arith.constant 9.99999974E-6 : f32
    %135 = vector.broadcast %cst_49 : f32 to vector<16x1xf32>
    %136 = arith.addf %132, %135 : vector<16x1xf32>
    %137 = math.rsqrt %136 : vector<16x1xf32>
    %138 = vector.broadcast %137 : vector<16x1xf32> to vector<16x32xf32>
    %139 = arith.mulf %134, %138 : vector<16x32xf32>
    %140 = vector.broadcast %10 : vector<1x32xf32> to vector<16x32xf32>
    %141 = arith.mulf %139, %140 : vector<16x32xf32>
    %142 = vector.broadcast %11 : vector<1x32xf32> to vector<16x32xf32>
    %143 = arith.addf %141, %142 : vector<16x32xf32>
    %c0_50 = arith.constant 0 : index
    %c0_51 = arith.constant 0 : index
    %144 = vector.load %arg9[%c0_50, %c0_51] : memref<16x32xf32, #tpu.memory_space<vmem>>, vector<16x32xf32>
    tpu.vector_store %arg9[%c0_50, %c0_51], %143 {strides = array<i32>} : memref<16x32xf32, #tpu.memory_space<vmem>>, vector<16x32xf32>,
    return
  }
  func.func @transform_0(%arg0: i32) -> (i32, i32) {
    %c0_i32 = arith.constant 0 : i32
    %c0_i32_0 = arith.constant 0 : i32
    return %arg0, %c0_i32 : i32, i32
  }
  func.func @transform_1(%arg0: i32) -> (i32, i32) {
    %c0_i32 = arith.constant 0 : i32
    %c0_i32_0 = arith.constant 0 : i32
    %c0_i32_1 = arith.constant 0 : i32
    return %c0_i32, %c0_i32_0 : i32, i32
  }
  func.func @transform_2(%arg0: i32) -> (i32, i32, i32) {
    %c0_i32 = arith.constant 0 : i32
    %c0_i32_0 = arith.constant 0 : i32
    %c0_i32_1 = arith.constant 0 : i32
    return %arg0, %c0_i32, %c0_i32_0 : i32, i32, i32
  }
  func.func @transform_3(%arg0: i32) -> (i32, i32, i32) {
    %c0_i32 = arith.constant 0 : i32
    %c0_i32_0 = arith.constant 0 : i32
    %c0_i32_1 = arith.constant 0 : i32
    %c0_i32_2 = arith.constant 0 : i32
    return %c0_i32, %c0_i32_0, %c0_i32_1 : i32, i32, i32
  }
  func.func @transform_4(%arg0: i32) -> (i32, i32) {
    %c0_i32 = arith.constant 0 : i32
    %c0_i32_0 = arith.constant 0 : i32
    %c0_i32_1 = arith.constant 0 : i32
    return %c0_i32, %c0_i32_0 : i32, i32
  }
  func.func @transform_5(%arg0: i32) -> (i32, i32) {
    %c0_i32 = arith.constant 0 : i32
    %c0_i32_0 = arith.constant 0 : i32
    %c0_i32_1 = arith.constant 0 : i32
    return %c0_i32, %c0_i32_0 : i32, i32
  }
  func.func @transform_6(%arg0: i32) -> (i32, i32) {
    %c0_i32 = arith.constant 0 : i32
    %c0_i32_0 = arith.constant 0 : i32
    %c0_i32_1 = arith.constant 0 : i32
    return %c0_i32, %c0_i32_0 : i32, i32
  }
  func.func @transform_7(%arg0: i32) -> (i32, i32) {
    %c0_i32 = arith.constant 0 : i32
    %c0_i32_0 = arith.constant 0 : i32
    %c0_i32_1 = arith.constant 0 : i32
    return %c0_i32, %c0_i32_0 : i32, i32
  }
  func.func @transform_8(%arg0: i32) -> (i32, i32) {
    %c0_i32 = arith.constant 0 : i32
    %c0_i32_0 = arith.constant 0 : i32
    return %arg0, %c0_i32 : i32, i32
  }
}

</mosaic_0001>

<llo_original>
// kernel: tpu_custom_call.1
$region0: #{tpu_custom_call.1}
  #allocation0 [shape = 'u32[]', space=smem, size = 0x4, offset = 0x4, fixed_abs, tag = 'smem constant byte address 0x4 - core index']
  #allocation1 [shape = 'u32[144,128]{1,0:T(1,128)}', space=vmem, size = 0x12000, scoped, tag = 'internal scratch']
  %s0 = inlined_call_operand.vmem [shape: f32[32,32], index: 0, kind: input, shape index: {}]
  %s1 = inlined_call_operand.vmem [shape: f32[8,32], index: 1, kind: input, shape index: {}]
  %s2 = inlined_call_operand.vmem [shape: s32[4,1,8], index: 2, kind: input, shape index: {}]
  %s3 = inlined_call_operand.hbm [shape: f32[4,32,32], index: 3, kind: input, shape index: {}]
  %s4 = inlined_call_operand.vmem [shape: f32[32,64], index: 4, kind: input, shape index: {}]
  %s5 = inlined_call_operand.vmem [shape: f32[64,32], index: 5, kind: input, shape index: {}]
  %s6 = inlined_call_operand.vmem [shape: f32[11,32], index: 6, kind: input, shape index: {}]
  %s7 = inlined_call_operand.vmem [shape: f32[1,64], index: 7, kind: input, shape index: {}]
  %s8 = inlined_call_operand.hbm [shape: f32[32,32], index: 8, kind: output, shape index: {}]
  %s9 = sld [smem:[#allocation0]]
  $region69: #{tpu_custom_call.1} parent=0
    _
  %s11 = ssub.s32 1, %s9
  %s12 = scalar_select 0, %s11, %s9
  $region1: #{tpu_custom_call.1} parent=0
    #allocation2 [shape = 'u8[65536]{0}', space=vmem, size = 0x10000, scoped, tag = 'input window, operand 3, single buffered']
    #allocation3 [shape = 's32[2]{0}', space=sflag, size = 0x8, scoped, tag = 'scoped memory for tpu_custom_call.1']
    #allocation4 [shape = 's32[2]{0}', space=sflag, size = 0x8, scoped, tag = 'scoped memory for tpu_custom_call.1']
    #allocation5 [shape = 'u8[16384]{0}', space=vmem, size = 0x4000, scoped, tag = 'output window, operand 0']
    %13 = vsyncpa [#allocation3], 0
    %14 = vsyncpa [#allocation4], 0
    %s15 = scalar_lea.sflag [#allocation4], 1
    %16 = vsyncpa %s15, 0
    loop: start=0, step=1, limit=4
    $region2: #{tpu_custom_call.1} parent=1 // loop_pre_header
      _
    $region3: #{tpu_custom_call.1} parent=1 // loop_header
      %s18 = sphi 0, %s22
      %p19 = scmp.ge.s32.totalorder %s18, 4
      %s28 = sphi 0, %s30
      %s31 = sphi 0, %s28
      %s32 = sphi 0, %s31
      %s48 = sphi 0, %s32
      %s52 = sphi 0, %s52
      %s54 = sphi 0, %s52
      %s55 = sphi 0, %s54
      %s69 = sphi 0, %s55
      %s75 = sphi 0, %s77
      %s78 = sphi 0, %s75
      %s79 = sphi 0, %s78
      %s95 = sphi 0, %s79
      %s99 = sphi 0, %s99
      %s101 = sphi 0, %s99
      %s102 = sphi 0, %s101
      %s116 = sphi 0, %s102
      %s120 = sphi 0, %s120
      %s122 = sphi 0, %s120
      %s123 = sphi 0, %s122
      %s137 = sphi 0, %s123
      %s141 = sphi 0, %s141
      %s143 = sphi 0, %s141
      %s144 = sphi 0, %s143
      %s158 = sphi 0, %s144
      %s162 = sphi 0, %s162
      %s164 = sphi 0, %s162
      %s165 = sphi 0, %s164
      %s179 = sphi 0, %s165
      %s183 = sphi 0, %s183
      %s185 = sphi 0, %s183
      %s186 = sphi 0, %s185
      %s200 = sphi 0, %s186
      %s206 = sphi 0, %s208
      %s209 = sphi 0, %s206
      %s210 = sphi 0, %s209
      %s226 = sphi 0, %s210
    $region4: #{tpu_custom_call.1} parent=1 // loop_header_branch
      %21 = sbr.rel (%p19) target = $region8
    $region5: #{tpu_custom_call.1} parent=1 // loop_body
      %s23 = ssub.s32 %s18, 1
      %s24 = ssub.s32 %s18, 2
      %s25 = sadd.s32 %s18, 1
      %s26 = ssub.s32 %s18, %s25
      %p27 = scmp.eq.s32.totalorder %s26, 0
      %s29 = sadd.s32 %s28, 1
      %s30 = scalar_select %p27, %s28, %s29
      %p33 = pneg %p27
      %p34 = scmp.eq.s32.totalorder %s18, 1
      %p35 = por %p33, %p34
      %p36 = scmp.ne.s32.totalorder %s28, %s31
      %p37 = scmp.eq.s32.totalorder %s18, 0
      %p38 = por %p36, %p37
      %p39 = scmp.ne.s32.totalorder %s28, %s31
      %p40 = scmp.eq.s32.totalorder %s23, 1
      %p41 = por %p39, %p40
      %p42 = scmp.ne.s32.totalorder %s31, %s32
      %p43 = scmp.eq.s32.totalorder %s23, 0
      %p44 = por %p42, %p43
      %p45 = scmp.ne.s32.totalorder %s31, %s32
      %p46 = scmp.eq.s32.totalorder %s24, 1
      %p47 = por %p45, %p46
      %p49 = scmp.ne.s32.totalorder %s32, %s48
      %p50 = scmp.eq.s32.totalorder %s24, 0
      %p51 = por %p49, %p50
      %s53 = sadd.s32 %s52, 1
      %p56 = scmp.eq.s32.totalorder %s18, 1
      %p57 = scmp.ne.s32.totalorder %s52, %s54
      %p58 = scmp.eq.s32.totalorder %s18, 0
      %p59 = por %p57, %p58
      %p60 = scmp.ne.s32.totalorder %s52, %s54
      %p61 = scmp.eq.s32.totalorder %s23, 1
      %p62 = por %p60, %p61
      %p63 = scmp.ne.s32.totalorder %s54, %s55
      %p64 = scmp.eq.s32.totalorder %s23, 0
      %p65 = por %p63, %p64
      %p66 = scmp.ne.s32.totalorder %s54, %s55
      %p67 = scmp.eq.s32.totalorder %s24, 1
      %p68 = por %p66, %p67
      %p70 = scmp.ne.s32.totalorder %s55, %s69
      %p71 = scmp.eq.s32.totalorder %s24, 0
      %p72 = por %p70, %p71
      %s73 = ssub.s32 %s18, %s25
      %p74 = scmp.eq.s32.totalorder %s73, 0
      %s76 = sadd.s32 %s75, 1
      %s77 = scalar_select %p74, %s75, %s76
      %p80 = pneg %p74
      %p81 = scmp.eq.s32.totalorder %s18, 1
      %p82 = por %p80, %p81
      %p83 = scmp.ne.s32.totalorder %s75, %s78
      %p84 = scmp.eq.s32.totalorder %s18, 0
      %p85 = por %p83, %p84
      %p86 = scmp.ne.s32.totalorder %s75, %s78
      %p87 = scmp.eq.s32.totalorder %s23, 1
      %p88 = por %p86, %p87
      %p89 = scmp.ne.s32.totalorder %s78, %s79
      %p90 = scmp.eq.s32.totalorder %s23, 0
      %p91 = por %p89, %p90
      %p92 = scmp.ne.s32.totalorder %s78, %s79
      %p93 = scmp.eq.s32.totalorder %s24, 1
      %p94 = por %p92, %p93
      %p96 = scmp.ne.s32.totalorder %s79, %s95
      %p97 = scmp.eq.s32.totalorder %s24, 0
      %p98 = por %p96, %p97
      %s100 = sadd.s32 %s99, 1
      %p103 = scmp.eq.s32.totalorder %s18, 1
      %p104 = scmp.ne.s32.totalorder %s99, %s101
      %p105 = scmp.eq.s32.totalorder %s18, 0
      %p106 = por %p104, %p105
      %p107 = scmp.ne.s32.totalorder %s99, %s101
      %p108 = scmp.eq.s32.totalorder %s23, 1
      %p109 = por %p107, %p108
      %p110 = scmp.ne.s32.totalorder %s101, %s102
      %p111 = scmp.eq.s32.totalorder %s23, 0
      %p112 = por %p110, %p111
      %p113 = scmp.ne.s32.totalorder %s101, %s102
      %p114 = scmp.eq.s32.totalorder %s24, 1
      %p115 = por %p113, %p114
      %p117 = scmp.ne.s32.totalorder %s102, %s116
      %p118 = scmp.eq.s32.totalorder %s24, 0
      %p119 = por %p117, %p118
      %s121 = sadd.s32 %s120, 1
      %p124 = scmp.eq.s32.totalorder %s18, 1
      %p125 = scmp.ne.s32.totalorder %s120, %s122
      %p126 = scmp.eq.s32.totalorder %s18, 0
      %p127 = por %p125, %p126
      %p128 = scmp.ne.s32.totalorder %s120, %s122
      %p129 = scmp.eq.s32.totalorder %s23, 1
      %p130 = por %p128, %p129
      %p131 = scmp.ne.s32.totalorder %s122, %s123
      %p132 = scmp.eq.s32.totalorder %s23, 0
      %p133 = por %p131, %p132
      %p134 = scmp.ne.s32.totalorder %s122, %s123
      %p135 = scmp.eq.s32.totalorder %s24, 1
      %p136 = por %p134, %p135
      %p138 = scmp.ne.s32.totalorder %s123, %s137
      %p139 = scmp.eq.s32.totalorder %s24, 0
      %p140 = por %p138, %p139
      %s142 = sadd.s32 %s141, 1
      %p145 = scmp.eq.s32.totalorder %s18, 1
      %p146 = scmp.ne.s32.totalorder %s141, %s143
      %p147 = scmp.eq.s32.totalorder %s18, 0
      %p148 = por %p146, %p147
      %p149 = scmp.ne.s32.totalorder %s141, %s143
      %p150 = scmp.eq.s32.totalorder %s23, 1
      %p151 = por %p149, %p150
      %p152 = scmp.ne.s32.totalorder %s143, %s144
      %p153 = scmp.eq.s32.totalorder %s23, 0
      %p154 = por %p152, %p153
      %p155 = scmp.ne.s32.totalorder %s143, %s144
      %p156 = scmp.eq.s32.totalorder %s24, 1
      %p157 = por %p155, %p156
      %p159 = scmp.ne.s32.totalorder %s144, %s158
      %p160 = scmp.eq.s32.totalorder %s24, 0
      %p161 = por %p159, %p160
      %s163 = sadd.s32 %s162, 1
      %p166 = scmp.eq.s32.totalorder %s18, 1
      %p167 = scmp.ne.s32.totalorder %s162, %s164
      %p168 = scmp.eq.s32.totalorder %s18, 0
      %p169 = por %p167, %p168
      %p170 = scmp.ne.s32.totalorder %s162, %s164
      %p171 = scmp.eq.s32.totalorder %s23, 1
      %p172 = por %p170, %p171
      %p173 = scmp.ne.s32.totalorder %s164, %s165
      %p174 = scmp.eq.s32.totalorder %s23, 0
      %p175 = por %p173, %p174
      %p176 = scmp.ne.s32.totalorder %s164, %s165
      %p177 = scmp.eq.s32.totalorder %s24, 1
      %p178 = por %p176, %p177
      %p180 = scmp.ne.s32.totalorder %s165, %s179
      %p181 = scmp.eq.s32.totalorder %s24, 0
      %p182 = por %p180, %p181
      %s184 = sadd.s32 %s183, 1
      %p187 = scmp.eq.s32.totalorder %s18, 1
      %p188 = scmp.ne.s32.totalorder %s183, %s185
      %p189 = scmp.eq.s32.totalorder %s18, 0
      %p190 = por %p188, %p189
      %p191 = scmp.ne.s32.totalorder %s183, %s185
      %p192 = scmp.eq.s32.totalorder %s23, 1
      %p193 = por %p191, %p192
      %p194 = scmp.ne.s32.totalorder %s185, %s186
      %p195 = scmp.eq.s32.totalorder %s23, 0
      %p196 = por %p194, %p195
      %p197 = scmp.ne.s32.totalorder %s185, %s186
      %p198 = scmp.eq.s32.totalorder %s24, 1
      %p199 = por %p197, %p198
      %p201 = scmp.ne.s32.totalorder %s186, %s200
      %p202 = scmp.eq.s32.totalorder %s24, 0
      %p203 = por %p201, %p202
      %s204 = ssub.s32 %s18, %s25
      %p205 = scmp.eq.s32.totalorder %s204, 0
      %s207 = sadd.s32 %s206, 1
      %s208 = scalar_select %p205, %s206, %s207
      %p211 = pneg %p205
      %p212 = scmp.eq.s32.totalorder %s18, 1
      %p213 = por %p211, %p212
      %p214 = scmp.ne.s32.totalorder %s206, %s209
      %p215 = scmp.eq.s32.totalorder %s18, 0
      %p216 = por %p214, %p215
      %p217 = scmp.ne.s32.totalorder %s206, %s209
      %p218 = scmp.eq.s32.totalorder %s23, 1
      %p219 = por %p217, %p218
      %p220 = scmp.ne.s32.totalorder %s209, %s210
      %p221 = scmp.eq.s32.totalorder %s23, 0
      %p222 = por %p220, %p221
      %p223 = scmp.ne.s32.totalorder %s209, %s210
      %p224 = scmp.eq.s32.totalorder %s24, 1
      %p225 = por %p223, %p224
      %p227 = scmp.ne.s32.totalorder %s210, %s226
      %p228 = scmp.eq.s32.totalorder %s24, 0
      %p229 = por %p227, %p228
      %p230 = scmp.le.s32.totalorder 1, %s18
      %p231 = scmp.lt.s32.totalorder %s18, 3
      %p232 = pnand %p230, %p231
      %p233 = pneg %p232
      // Predicated region
      $region9: #{tpu_custom_call.1} parent=5 // pred_check
        _
      $region10: #{tpu_custom_call.1} parent=5 // pred_check_branch
        %235 = sbr.rel (%p232) target = $region12
      $region11: #{tpu_custom_call.1} parent=5 // pred_region
        %s236 = ssub.s32 %s18, 1
        // Predicated region
        $region13: #{tpu_custom_call.1} parent=11 // pred_check
          %p237 = pneg %p65
        $region14: #{tpu_custom_call.1} parent=11 // pred_check_branch
          %239 = sbr.rel (%p237) target = $region16
        $region15: #{tpu_custom_call.1} parent=11 // pred_region
          _
        $region16: #{tpu_custom_call.1} parent=11 // pred_fallthru
          _
        // Predicated region
        $region17: #{tpu_custom_call.1} parent=11 // pred_check
          %p240 = pneg %p112
        $region18: #{tpu_custom_call.1} parent=11 // pred_check_branch
          %242 = sbr.rel (%p240) target = $region20
        $region19: #{tpu_custom_call.1} parent=11 // pred_region
          %s244 = ssub.s32 2048, 2048
          %245 = vsyncadd [#allocation3], %s244
          %s246 = sshll.u32 [#allocation2], 4
          %s247 = int_to_ptr.vmem [resolvable:$true] %s246
          %252 = dma.hbm_to_vmem [thread:$0]  %s3, 2048, %s247, [#allocation3], 128, 128, 8
        $region20: #{tpu_custom_call.1} parent=11 // pred_fallthru
          _
        // Predicated region
        $region21: #{tpu_custom_call.1} parent=11 // pred_check
          %p253 = pneg %p133
        $region22: #{tpu_custom_call.1} parent=11 // pred_check_branch
          %255 = sbr.rel (%p253) target = $region24
        $region23: #{tpu_custom_call.1} parent=11 // pred_region
          _
        $region24: #{tpu_custom_call.1} parent=11 // pred_fallthru
          _
        // Predicated region
        $region25: #{tpu_custom_call.1} parent=11 // pred_check
          %p256 = pneg %p154
        $region26: #{tpu_custom_call.1} parent=11 // pred_check_branch
          %258 = sbr.rel (%p256) target = $region28
        $region27: #{tpu_custom_call.1} parent=11 // pred_region
          _
        $region28: #{tpu_custom_call.1} parent=11 // pred_fallthru
          _
        // Predicated region
        $region29: #{tpu_custom_call.1} parent=11 // pred_check
          %p259 = pneg %p175
        $region30: #{tpu_custom_call.1} parent=11 // pred_check_branch
          %261 = sbr.rel (%p259) target = $region32
        $region31: #{tpu_custom_call.1} parent=11 // pred_region
          _
        $region32: #{tpu_custom_call.1} parent=11 // pred_fallthru
          _
        // Predicated region
        $region33: #{tpu_custom_call.1} parent=11 // pred_check
          %p262 = pneg %p196
        $region34: #{tpu_custom_call.1} parent=11 // pred_check_branch
          %264 = sbr.rel (%p262) target = $region36
        $region35: #{tpu_custom_call.1} parent=11 // pred_region
          _
        $region36: #{tpu_custom_call.1} parent=11 // pred_fallthru
          _
      $region12: #{tpu_custom_call.1} parent=5 // pred_fallthru
        _
      %p265 = scmp.lt.s32.totalorder %s18, 2
      // Predicated region
      $region37: #{tpu_custom_call.1} parent=5 // pred_check
        %p266 = pneg %p265
      $region38: #{tpu_custom_call.1} parent=5 // pred_check_branch
        %268 = sbr.rel (%p266) target = $region40
      $region39: #{tpu_custom_call.1} parent=5 // pred_region
        // Predicated region
        $region41: #{tpu_custom_call.1} parent=39 // pred_check
          %p269 = pneg %p38
        $region42: #{tpu_custom_call.1} parent=39 // pred_check_branch
          %271 = sbr.rel (%p269) target = $region44
        $region43: #{tpu_custom_call.1} parent=39 // pred_region
          %s272 = smul.u32 2, %s18
          %p273 = scmp.lt.s32.totalorder %s272, 3
          %s274 = scalar_select %p273, %s272, 3
          %s275 = smul.addr %s274, 8
          %s276 = scalar_lea.vmem %s0, %s275
          %s277 = smul.u32 2, %s18
        $region44: #{tpu_custom_call.1} parent=39 // pred_fallthru
          _
        // Predicated region
        $region45: #{tpu_custom_call.1} parent=39 // pred_check
          %p278 = pneg %p85
        $region46: #{tpu_custom_call.1} parent=39 // pred_check_branch
          %280 = sbr.rel (%p278) target = $region48
        $region47: #{tpu_custom_call.1} parent=39 // pred_region
          %s281 = smul.u32 2, %s18
          %p282 = scmp.lt.s32.totalorder %s281, 3
          %s283 = scalar_select %p282, %s281, 3
          %s284 = scalar_lea.vmem %s2, %s283
          %s285 = smul.u32 2, %s18
        $region48: #{tpu_custom_call.1} parent=39 // pred_fallthru
          _
      $region40: #{tpu_custom_call.1} parent=5 // pred_fallthru
        _
      %p286 = scmp.le.s32.totalorder 1, %s18
      %p287 = scmp.lt.s32.totalorder %s18, 3
      %p288 = pnand %p286, %p287
      %p289 = pneg %p288
      // Predicated region
      $region49: #{tpu_custom_call.1} parent=5 // pred_check
        _
      $region50: #{tpu_custom_call.1} parent=5 // pred_check_branch
        %291 = sbr.rel (%p288) target = $region52
      $region51: #{tpu_custom_call.1} parent=5 // pred_region
        %s292 = ssub.s32 %s18, 1
        // Predicated region
        $region53: #{tpu_custom_call.1} parent=51 // pred_check
          %p293 = pneg %p112
        $region54: #{tpu_custom_call.1} parent=51 // pred_check_branch
          %295 = sbr.rel (%p293) target = $region56
        $region55: #{tpu_custom_call.1} parent=51 // pred_region
          %296 = dma.done [#allocation3], 2048
        $region56: #{tpu_custom_call.1} parent=51 // pred_fallthru
          _
        %s297 = smul.u32 2, %s23
        %p298 = scmp.lt.s32.totalorder %s297, 3
        %s299 = scalar_select %p298, %s297, 3
        %s300 = smul.addr %s299, 8
        %s301 = scalar_lea.vmem %s0, %s300
        %p302 = pneg %p44
        %p303 = pneg %p41
        %p304 = pneg %p65
        %p305 = pneg %p62
        %s306 = smul.u32 2, %s23
        %p307 = scmp.lt.s32.totalorder %s306, 3
        %s308 = scalar_select %p307, %s306, 3
        %s309 = scalar_lea.vmem %s2, %s308
        %p310 = pneg %p91
        %p311 = pneg %p88
        %p312 = pneg %p112
        %p313 = pneg %p109
        %p314 = pneg %p133
        %p315 = pneg %p130
        %p316 = pneg %p154
        %p317 = pneg %p151
        %p318 = pneg %p175
        %p319 = pneg %p172
        %p320 = pneg %p196
        %p321 = pneg %p193
        %p322 = pneg %p222
        %p323 = pneg %p219
        %s324 = sand.u32 %s209, 1
        %s325 = scalar_lea.sflag [#allocation4], %s324
        %s326 = sand.u32 %s209, 1
        %s327 = smul.addr %s326, 16
        %s328 = scalar_lea.vmem [#allocation5], %s327
        %s329 = smul.u32 2, %s23
        %p330 = scmp.lt.s32.totalorder %s329, 3
        %s331 = scalar_select %p330, %s329, 3
        %s332 = smul.addr %s331, 8
        %s333 = scalar_lea.vmem %s0, %s332
        %s334 = smul.u32 2, %s23
        %s335 = smul.u32 2, %s23
        %p336 = scmp.lt.s32.totalorder %s335, 3
        %s337 = scalar_select %p336, %s335, 3
        %s338 = scalar_lea.vmem %s2, %s337
        %s339 = smul.u32 2, %s23
        %s340 = smul.u32 2, %s23
        %v341 = vld [vmem:[%s6] sm:$0xff]
        %v342 = vld [vmem:[%s6 + $0x8] sm:$0x7]
        %v343 = vld [vmem:[%s333] sm:$0xff]
        %v344 = vld [vmem:[%s333 + $0x8] sm:$0xff]
        %v345 = vld [vmem:[%s1] sm:$0xff]
        %v346 = vadd.f32 %v343, %v345
        %v347 = vadd.f32 %v344, %v345
        %vm348 = vcmask 261120
        %v349 = vsel %vm348, %v346, 0.0
        %350 = vadd.xlane.f32.xlu0 %v349
        %v351 = vpop.xlane.xlu0 %350
        %v352 = vsel %vm348, %v347, 0.0
        %353 = vadd.xlane.f32.xlu0 %v352
        %v354 = vpop.xlane.xlu0 %353
        %v355 = vrcp.pop 32.0
        %v356 = vmul.f32 %v351, %v355
        %v357 = vmul.f32 %v354, %v355
        %v358 = vsub.f32 %v346, %v356
        %v359 = vsub.f32 %v347, %v357
        %v360 = vmul.f32 %v358, %v358
        %v361 = vmul.f32 %v359, %v359
        %v362 = vsel %vm348, %v360, 0.0
        %363 = vadd.xlane.f32.xlu0 %v362
        %v364 = vpop.xlane.xlu0 %363
        %v365 = vsel %vm348, %v361, 0.0
        %366 = vadd.xlane.f32.xlu0 %v365
        %v367 = vpop.xlane.xlu0 %366
        %v368 = vmul.f32 %v364, %v355
        %v369 = vmul.f32 %v367, %v355
        %v370 = vadd.f32 %v368, 1e-05
        %v371 = vadd.f32 %v369, 1e-05
        %v372 = vrsqrt.pop %v370
        %v373 = vrsqrt.pop %v371
        %v374 = vmul.f32 %v358, %v372
        %v375 = vmul.f32 %v359, %v373
        %v376 = vlaneseq
        %v377 = vshrl.u32 %v376, 7
        %v378 = vsub.s32 5, %v377
        %v379 = vrot.slane %v341, %v378
        %v380 = vmul.f32 %v374, %v379
        %v381 = vmul.f32 %v375, %v379
        %v382 = vlaneseq
        %v383 = vshrl.u32 %v382, 7
        %v384 = vsub.s32 6, %v383
        %v385 = vrot.slane %v341, %v384
        %v386 = vadd.f32 %v380, %v385
        %v387 = vadd.f32 %v381, %v385
        %v388 = vld [vmem:[#allocation2] sm:$0xff]
        %v389 = vld [vmem:[#allocation2 + $0x8] sm:$0xff]
        %v390 = vld [vmem:[#allocation2 + $0x10] sm:$0xff]
        %v391 = vld [vmem:[#allocation2 + $0x18] sm:$0xff]
        %v392 = vlaneseq
        %v393 = vshrl.u32 %v392, 7
        %v394 = vsub.s32 0, %v393
        %v395 = vrot.slane %v341, %v394
        %v397 = vsel %vm348, %v386, 0
        %v400 = vsel %vm348, %v387, 0
        %402 = vmatprep.subr.mxu0 0.0
        %403 = vmatpush1.msra.mxu0 %v388
        %404 = vmatprep.subr.mxu0 0.0
        %405 = vmatpush1.msra.mxu0 %v389
        %406 = vmatprep.subr.mxu0 0.0
        %407 = vmatpush1.msra.mxu0 %v390
        %408 = vmatprep.subr.mxu0 0.0
        %409 = vmatpush1.msra.mxu0 %v391
        %410 = vmatprep.subr.mxu0 0.0
        %411 = vmatpush1.msra.mxu0 0.0
        %412 = vmatprep.subr.mxu0 0.0
        %413 = vmatpush1.msra.mxu0 0.0
        %414 = vmatprep.subr.mxu0 0.0
        %415 = vmatpush1.msra.mxu0 0.0
        %416 = vmatprep.subr.mxu0 0.0
        %417 = vmatpush1.msra.mxu0 0.0
        %418 = vmatprep.subr.mxu0 0.0
        %419 = vmatpush1.msra.mxu0 0.0
        %420 = vmatprep.subr.mxu0 0.0
        %421 = vmatpush1.msra.mxu0 0.0
        %422 = vmatprep.subr.mxu0 0.0
        %423 = vmatpush1.msra.mxu0 0.0
        %424 = vmatprep.subr.mxu0 0.0
        %425 = vmatpush1.msra.mxu0 0.0
        %426 = vmatprep.subr.mxu0 0.0
        %427 = vmatpush1.msra.mxu0 0.0
        %428 = vmatprep.subr.mxu0 0.0
        %429 = vmatpush1.msra.mxu0 0.0
        %430 = vmatprep.subr.mxu0 0.0
        %431 = vmatpush1.msra.mxu0 0.0
        %432 = vmatprep.subr.mxu0 0.0
        %433 = vmatpush1.msra.mxu0 0.0
        %434 = vmatprep.subr.mxu0 0.0
        %435 = vmatpush1.msra.mxu0 0.0
        %436 = vmatprep.subr.mxu0 0.0
        %437 = vmatpush1.msra.mxu0 0.0
        %438 = vmatprep.subr.mxu0 0.0
        %439 = vmatpush1.msra.mxu0 0.0
        %440 = vmatprep.subr.mxu0 0.0
        %441 = vmatpush1.msra.mxu0 0.0
        %442 = vmatprep.subr.mxu0 0.0
        %443 = vmatpush1.msra.mxu0 0.0
        %444 = vmatprep.subr.mxu0 0.0
        %445 = vmatpush1.msra.mxu0 0.0
        %446 = vmatprep.subr.mxu0 0.0
        %447 = vmatpush1.msra.mxu0 0.0
        %448 = vmatprep.subr.mxu0 0.0
        %449 = vmatpush1.msra.mxu0 0.0
        %450 = vmatprep.subr.mxu0 0.0
        %451 = vmatpush1.msra.mxu0 0.0
        %452 = vmatprep.subr.mxu0 0.0
        %453 = vmatpush1.msra.mxu0 0.0
        %454 = vmatprep.subr.mxu0 0.0
        %455 = vmatpush1.msra.mxu0 0.0
        %456 = vmatprep.subr.mxu0 0.0
        %457 = vmatpush1.msra.mxu0 0.0
        %458 = vmatprep.subr.mxu0 0.0
        %459 = vmatpush1.msra.mxu0 0.0
        %460 = vmatprep.subr.mxu0 0.0
        %461 = vmatpush1.msra.mxu0 0.0
        %462 = vmatprep.subr.mxu0 0.0
        %463 = vmatpush1.msra.mxu0 0.0
        %464 = vmatprep.subr.mxu0 0.0
        %465 = vmatpush1.msra.mxu0 0.0
        %466 = vmatprep.mubr.f32.mxu0 0.0
        %467 = vmatmul.mubr.f32.gmra.mrb[0].mxu0 %v397
        %v468 = vpop.f32.mrb[0].mxu0
        %v469 = vadd.f32 %v395, %v468
        %v470 = vpop.f32.mrb[0].mxu0
        %471 = vmatprep.mubr.f32.mxu0 0.0
        %472 = vmatmul.mubr.f32.gmra.mrb[0].mxu0 %v400
        %v473 = vpop.f32.mrb[0].mxu0
        %v474 = vadd.f32 %v395, %v473
        %v475 = vpop.f32.mrb[0].mxu0
        %476 = vdwg.mxu0
        %s477 = scalar_lea.vmem [#allocation2], 32
        %v478 = vld [vmem:[%s477] sm:$0xff]
        %v479 = vld [vmem:[%s477 + $0x8] sm:$0xff]
        %v480 = vld [vmem:[%s477 + $0x10] sm:$0xff]
        %v481 = vld [vmem:[%s477 + $0x18] sm:$0xff]
        %v482 = vlaneseq
        %v483 = vshrl.u32 %v482, 7
        %v484 = vsub.s32 1, %v483
        %v485 = vrot.slane %v341, %v484
        %486 = vmatprep.subr.mxu0 0.0
        %487 = vmatpush1.msra.mxu0 %v478
        %488 = vmatprep.subr.mxu0 0.0
        %489 = vmatpush1.msra.mxu0 %v479
        %490 = vmatprep.subr.mxu0 0.0
        %491 = vmatpush1.msra.mxu0 %v480
        %492 = vmatprep.subr.mxu0 0.0
        %493 = vmatpush1.msra.mxu0 %v481
        %494 = vmatprep.subr.mxu0 0.0
        %495 = vmatpush1.msra.mxu0 0.0
        %496 = vmatprep.subr.mxu0 0.0
        %497 = vmatpush1.msra.mxu0 0.0
        %498 = vmatprep.subr.mxu0 0.0
        %499 = vmatpush1.msra.mxu0 0.0
        %500 = vmatprep.subr.mxu0 0.0
        %501 = vmatpush1.msra.mxu0 0.0
        %502 = vmatprep.subr.mxu0 0.0
        %503 = vmatpush1.msra.mxu0 0.0
        %504 = vmatprep.subr.mxu0 0.0
        %505 = vmatpush1.msra.mxu0 0.0
        %506 = vmatprep.subr.mxu0 0.0
        %507 = vmatpush1.msra.mxu0 0.0
        %508 = vmatprep.subr.mxu0 0.0
        %509 = vmatpush1.msra.mxu0 0.0
        %510 = vmatprep.subr.mxu0 0.0
        %511 = vmatpush1.msra.mxu0 0.0
        %512 = vmatprep.subr.mxu0 0.0
        %513 = vmatpush1.msra.mxu0 0.0
        %514 = vmatprep.subr.mxu0 0.0
        %515 = vmatpush1.msra.mxu0 0.0
        %516 = vmatprep.subr.mxu0 0.0
        %517 = vmatpush1.msra.mxu0 0.0
        %518 = vmatprep.subr.mxu0 0.0
        %519 = vmatpush1.msra.mxu0 0.0
        %520 = vmatprep.subr.mxu0 0.0
        %521 = vmatpush1.msra.mxu0 0.0
        %522 = vmatprep.subr.mxu0 0.0
        %523 = vmatpush1.msra.mxu0 0.0
        %524 = vmatprep.subr.mxu0 0.0
        %525 = vmatpush1.msra.mxu0 0.0
        %526 = vmatprep.subr.mxu0 0.0
        %527 = vmatpush1.msra.mxu0 0.0
        %528 = vmatprep.subr.mxu0 0.0
        %529 = vmatpush1.msra.mxu0 0.0
        %530 = vmatprep.subr.mxu0 0.0
        %531 = vmatpush1.msra.mxu0 0.0
        %532 = vmatprep.subr.mxu0 0.0
        %533 = vmatpush1.msra.mxu0 0.0
        %534 = vmatprep.subr.mxu0 0.0
        %535 = vmatpush1.msra.mxu0 0.0
        %536 = vmatprep.subr.mxu0 0.0
        %537 = vmatpush1.msra.mxu0 0.0
        %538 = vmatprep.subr.mxu0 0.0
        %539 = vmatpush1.msra.mxu0 0.0
        %540 = vmatprep.subr.mxu0 0.0
        %541 = vmatpush1.msra.mxu0 0.0
        %542 = vmatprep.subr.mxu0 0.0
        %543 = vmatpush1.msra.mxu0 0.0
        %544 = vmatprep.subr.mxu0 0.0
        %545 = vmatpush1.msra.mxu0 0.0
        %546 = vmatprep.subr.mxu0 0.0
        %547 = vmatpush1.msra.mxu0 0.0
        %548 = vmatprep.subr.mxu0 0.0
        %549 = vmatpush1.msra.mxu0 0.0
        %550 = vmatprep.mubr.f32.mxu0 0.0
        %551 = vmatmul.mubr.f32.gmra.mrb[0].mxu0 %v397
        %v552 = vpop.f32.mrb[0].mxu0
        %v553 = vadd.f32 %v485, %v552
        %v554 = vpop.f32.mrb[0].mxu0
        %555 = vmatprep.mubr.f32.mxu0 0.0
        %556 = vmatmul.mubr.f32.gmra.mrb[0].mxu0 %v400
        %v557 = vpop.f32.mrb[0].mxu0
        %v558 = vadd.f32 %v485, %v557
        %v559 = vpop.f32.mrb[0].mxu0
        %560 = vdwg.mxu0
        %s561 = scalar_lea.vmem [#allocation2], 64
        %v562 = vld [vmem:[%s561] sm:$0xff]
        %v563 = vld [vmem:[%s561 + $0x8] sm:$0xff]
        %v564 = vld [vmem:[%s561 + $0x10] sm:$0xff]
        %v565 = vld [vmem:[%s561 + $0x18] sm:$0xff]
        %v566 = vlaneseq
        %v567 = vshrl.u32 %v566, 7
        %v568 = vsub.s32 2, %v567
        %v569 = vrot.slane %v341, %v568
        %570 = vmatprep.subr.mxu0 0.0
        %571 = vmatpush1.msra.mxu0 %v562
        %572 = vmatprep.subr.mxu0 0.0
        %573 = vmatpush1.msra.mxu0 %v563
        %574 = vmatprep.subr.mxu0 0.0
        %575 = vmatpush1.msra.mxu0 %v564
        %576 = vmatprep.subr.mxu0 0.0
        %577 = vmatpush1.msra.mxu0 %v565
        %578 = vmatprep.subr.mxu0 0.0
        %579 = vmatpush1.msra.mxu0 0.0
        %580 = vmatprep.subr.mxu0 0.0
        %581 = vmatpush1.msra.mxu0 0.0
        %582 = vmatprep.subr.mxu0 0.0
        %583 = vmatpush1.msra.mxu0 0.0
        %584 = vmatprep.subr.mxu0 0.0
        %585 = vmatpush1.msra.mxu0 0.0
        %586 = vmatprep.subr.mxu0 0.0
        %587 = vmatpush1.msra.mxu0 0.0
        %588 = vmatprep.subr.mxu0 0.0
        %589 = vmatpush1.msra.mxu0 0.0
        %590 = vmatprep.subr.mxu0 0.0
        %591 = vmatpush1.msra.mxu0 0.0
        %592 = vmatprep.subr.mxu0 0.0
        %593 = vmatpush1.msra.mxu0 0.0
        %594 = vmatprep.subr.mxu0 0.0
        %595 = vmatpush1.msra.mxu0 0.0
        %596 = vmatprep.subr.mxu0 0.0
        %597 = vmatpush1.msra.mxu0 0.0
        %598 = vmatprep.subr.mxu0 0.0
        %599 = vmatpush1.msra.mxu0 0.0
        %600 = vmatprep.subr.mxu0 0.0
        %601 = vmatpush1.msra.mxu0 0.0
        %602 = vmatprep.subr.mxu0 0.0
        %603 = vmatpush1.msra.mxu0 0.0
        %604 = vmatprep.subr.mxu0 0.0
        %605 = vmatpush1.msra.mxu0 0.0
        %606 = vmatprep.subr.mxu0 0.0
        %607 = vmatpush1.msra.mxu0 0.0
        %608 = vmatprep.subr.mxu0 0.0
        %609 = vmatpush1.msra.mxu0 0.0
        %610 = vmatprep.subr.mxu0 0.0
        %611 = vmatpush1.msra.mxu0 0.0
        %612 = vmatprep.subr.mxu0 0.0
        %613 = vmatpush1.msra.mxu0 0.0
        %614 = vmatprep.subr.mxu0 0.0
        %615 = vmatpush1.msra.mxu0 0.0
        %616 = vmatprep.subr.mxu0 0.0
        %617 = vmatpush1.msra.mxu0 0.0
        %618 = vmatprep.subr.mxu0 0.0
        %619 = vmatpush1.msra.mxu0 0.0
        %620 = vmatprep.subr.mxu0 0.0
        %621 = vmatpush1.msra.mxu0 0.0
        %622 = vmatprep.subr.mxu0 0.0
        %623 = vmatpush1.msra.mxu0 0.0
        %624 = vmatprep.subr.mxu0 0.0
        %625 = vmatpush1.msra.mxu0 0.0
        %626 = vmatprep.subr.mxu0 0.0
        %627 = vmatpush1.msra.mxu0 0.0
        %628 = vmatprep.subr.mxu0 0.0
        %629 = vmatpush1.msra.mxu0 0.0
        %630 = vmatprep.subr.mxu0 0.0
        %631 = vmatpush1.msra.mxu0 0.0
        %632 = vmatprep.subr.mxu0 0.0
        %633 = vmatpush1.msra.mxu0 0.0
        %634 = vmatprep.mubr.f32.mxu0 0.0
        %635 = vmatmul.mubr.f32.gmra.mrb[0].mxu0 %v397
        %v636 = vpop.f32.mrb[0].mxu0
        %v637 = vadd.f32 %v569, %v636
        %v638 = vpop.f32.mrb[0].mxu0
        %639 = vmatprep.mubr.f32.mxu0 0.0
        %640 = vmatmul.mubr.f32.gmra.mrb[0].mxu0 %v400
        %v641 = vpop.f32.mrb[0].mxu0
        %v642 = vadd.f32 %v569, %v641
        %v643 = vpop.f32.mrb[0].mxu0
        %644 = vdwg.mxu0
        %v645 = vmul.f32 %v469, 0.17677669
        %v646 = vmul.f32 %v474, 0.17677669
        %v648 = vsel %vm348, %v645, 0
        %v651 = vsel %vm348, %v553, 0
        %653 = vmatprep.subr.mxu0 0.0
        %654 = vmatpush1.xpose.msra.mxu0 %v651
        %655 = vmatprep.subr.mxu0 0.0
        %656 = vmatpush1.xpose.msra.mxu0 0.0
        %657 = vmatprep.subr.mxu0 0.0
        %658 = vmatpush1.xpose.msra.mxu0 0.0
        %659 = vmatprep.subr.mxu0 0.0
        %660 = vmatpush1.xpose.msra.mxu0 0.0
        %661 = vmatprep.subr.mxu0 0.0
        %662 = vmatpush1.xpose.msra.mxu0 0.0
        %663 = vmatprep.subr.mxu0 0.0
        %664 = vmatpush1.xpose.msra.mxu0 0.0
        %665 = vmatprep.subr.mxu0 0.0
        %666 = vmatpush1.xpose.msra.mxu0 0.0
        %667 = vmatprep.subr.mxu0 0.0
        %668 = vmatpush1.xpose.msra.mxu0 0.0
        %669 = vmatprep.subr.mxu0 0.0
        %670 = vmatpush1.xpose.msra.mxu0 0.0
        %671 = vmatprep.subr.mxu0 0.0
        %672 = vmatpush1.xpose.msra.mxu0 0.0
        %673 = vmatprep.subr.mxu0 0.0
        %674 = vmatpush1.xpose.msra.mxu0 0.0
        %675 = vmatprep.subr.mxu0 0.0
        %676 = vmatpush1.xpose.msra.mxu0 0.0
        %677 = vmatprep.subr.mxu0 0.0
        %678 = vmatpush1.xpose.msra.mxu0 0.0
        %679 = vmatprep.subr.mxu0 0.0
        %680 = vmatpush1.xpose.msra.mxu0 0.0
        %681 = vmatprep.subr.mxu0 0.0
        %682 = vmatpush1.xpose.msra.mxu0 0.0
        %683 = vmatprep.subr.mxu0 0.0
        %684 = vmatpush1.xpose.msra.mxu0 0.0
        %685 = vmatprep.subr.mxu0 0.0
        %686 = vmatpush1.xpose.msra.mxu0 0.0
        %687 = vmatprep.subr.mxu0 0.0
        %688 = vmatpush1.xpose.msra.mxu0 0.0
        %689 = vmatprep.subr.mxu0 0.0
        %690 = vmatpush1.xpose.msra.mxu0 0.0
        %691 = vmatprep.subr.mxu0 0.0
        %692 = vmatpush1.xpose.msra.mxu0 0.0
        %693 = vmatprep.subr.mxu0 0.0
        %694 = vmatpush1.xpose.msra.mxu0 0.0
        %695 = vmatprep.subr.mxu0 0.0
        %696 = vmatpush1.xpose.msra.mxu0 0.0
        %697 = vmatprep.subr.mxu0 0.0
        %698 = vmatpush1.xpose.msra.mxu0 0.0
        %699 = vmatprep.subr.mxu0 0.0
        %700 = vmatpush1.xpose.msra.mxu0 0.0
        %701 = vmatprep.subr.mxu0 0.0
        %702 = vmatpush1.xpose.msra.mxu0 0.0
        %703 = vmatprep.subr.mxu0 0.0
        %704 = vmatpush1.xpose.msra.mxu0 0.0
        %705 = vmatprep.subr.mxu0 0.0
        %706 = vmatpush1.xpose.msra.mxu0 0.0
        %707 = vmatprep.subr.mxu0 0.0
        %708 = vmatpush1.xpose.msra.mxu0 0.0
        %709 = vmatprep.subr.mxu0 0.0
        %710 = vmatpush1.xpose.msra.mxu0 0.0
        %711 = vmatprep.subr.mxu0 0.0
        %712 = vmatpush1.xpose.msra.mxu0 0.0
        %713 = vmatprep.subr.mxu0 0.0
        %714 = vmatpush1.xpose.msra.mxu0 0.0
        %715 = vmatprep.subr.mxu0 0.0
        %716 = vmatpush1.xpose.msra.mxu0 0.0
        %717 = vmatprep.mubr.f32.mxu0 0.0
        %718 = vmatmul.mubr.f32.gmra.mrb[0].mxu0 %v648
        %v719 = vpop.f32.mrb[0].mxu0
        %v720 = vadd.f32 0.0, %v719
        %v721 = vpop.f32.mrb[0].mxu0
        %722 = vdwg.mxu0
        %v724 = vsel %vm348, %v646, 0
        %v727 = vsel %vm348, %v558, 0
        %729 = vmatprep.subr.mxu0 0.0
        %730 = vmatpush1.xpose.msra.mxu0 %v727
        %731 = vmatprep.subr.mxu0 0.0
        %732 = vmatpush1.xpose.msra.mxu0 0.0
        %733 = vmatprep.subr.mxu0 0.0
        %734 = vmatpush1.xpose.msra.mxu0 0.0
        %735 = vmatprep.subr.mxu0 0.0
        %736 = vmatpush1.xpose.msra.mxu0 0.0
        %737 = vmatprep.subr.mxu0 0.0
        %738 = vmatpush1.xpose.msra.mxu0 0.0
        %739 = vmatprep.subr.mxu0 0.0
        %740 = vmatpush1.xpose.msra.mxu0 0.0
        %741 = vmatprep.subr.mxu0 0.0
        %742 = vmatpush1.xpose.msra.mxu0 0.0
        %743 = vmatprep.subr.mxu0 0.0
        %744 = vmatpush1.xpose.msra.mxu0 0.0
        %745 = vmatprep.subr.mxu0 0.0
        %746 = vmatpush1.xpose.msra.mxu0 0.0
        %747 = vmatprep.subr.mxu0 0.0
        %748 = vmatpush1.xpose.msra.mxu0 0.0
        %749 = vmatprep.subr.mxu0 0.0
        %750 = vmatpush1.xpose.msra.mxu0 0.0
        %751 = vmatprep.subr.mxu0 0.0
        %752 = vmatpush1.xpose.msra.mxu0 0.0
        %753 = vmatprep.subr.mxu0 0.0
        %754 = vmatpush1.xpose.msra.mxu0 0.0
        %755 = vmatprep.subr.mxu0 0.0
        %756 = vmatpush1.xpose.msra.mxu0 0.0
        %757 = vmatprep.subr.mxu0 0.0
        %758 = vmatpush1.xpose.msra.mxu0 0.0
        %759 = vmatprep.subr.mxu0 0.0
        %760 = vmatpush1.xpose.msra.mxu0 0.0
        %761 = vmatprep.subr.mxu0 0.0
        %762 = vmatpush1.xpose.msra.mxu0 0.0
        %763 = vmatprep.subr.mxu0 0.0
        %764 = vmatpush1.xpose.msra.mxu0 0.0
        %765 = vmatprep.subr.mxu0 0.0
        %766 = vmatpush1.xpose.msra.mxu0 0.0
        %767 = vmatprep.subr.mxu0 0.0
        %768 = vmatpush1.xpose.msra.mxu0 0.0
        %769 = vmatprep.subr.mxu0 0.0
        %770 = vmatpush1.xpose.msra.mxu0 0.0
        %771 = vmatprep.subr.mxu0 0.0
        %772 = vmatpush1.xpose.msra.mxu0 0.0
        %773 = vmatprep.subr.mxu0 0.0
        %774 = vmatpush1.xpose.msra.mxu0 0.0
        %775 = vmatprep.subr.mxu0 0.0
        %776 = vmatpush1.xpose.msra.mxu0 0.0
        %777 = vmatprep.subr.mxu0 0.0
        %778 = vmatpush1.xpose.msra.mxu0 0.0
        %779 = vmatprep.subr.mxu0 0.0
        %780 = vmatpush1.xpose.msra.mxu0 0.0
        %781 = vmatprep.subr.mxu0 0.0
        %782 = vmatpush1.xpose.msra.mxu0 0.0
        %783 = vmatprep.subr.mxu0 0.0
        %784 = vmatpush1.xpose.msra.mxu0 0.0
        %785 = vmatprep.subr.mxu0 0.0
        %786 = vmatpush1.xpose.msra.mxu0 0.0
        %787 = vmatprep.subr.mxu0 0.0
        %788 = vmatpush1.xpose.msra.mxu0 0.0
        %789 = vmatprep.subr.mxu0 0.0
        %790 = vmatpush1.xpose.msra.mxu0 0.0
        %791 = vmatprep.subr.mxu0 0.0
        %792 = vmatpush1.xpose.msra.mxu0 0.0
        %793 = vmatprep.mubr.f32.mxu0 0.0
        %794 = vmatmul.mubr.f32.gmra.mrb[0].mxu0 %v724
        %v795 = vpop.f32.mrb[0].mxu0
        %v796 = vadd.f32 0.0, %v795
        %v797 = vpop.f32.mrb[0].mxu0
        %798 = vdwg.mxu0
        %v799 = vld [vmem:[%s338] sm:$0x1]
        %v800 = vld [vmem:[%s338 + $0x1] sm:$0x1]
        %vm801 = vcmp.eq.s32.totalorder %v799, 0
        %vm802 = vcmp.eq.s32.totalorder %v800, 0
        %v803 = vsel %vm801, 1, 0
        %v804 = vsel %vm802, 1, 0
        %v805 = vlaneseq
        %v806 = vshrl.u32 %v805, 7
        %v807 = vsub.s32 0, %v806
        %v808 = vrot.slane %v803, %v807
        %v809 = vlaneseq
        %v810 = vshrl.u32 %v809, 7
        %v811 = vsub.s32 0, %v810
        %v812 = vrot.slane %v804, %v811
        %vm813 = vcmp.eq.s32.totalorder %v808, 1
        %vm814 = vcmp.eq.s32.totalorder %v812, 1
        %v815 = vsel %vm813, -1e+09, %v720
        %v816 = vsel %vm814, -1e+09, %v796
        %vm817 = vcmask 64512
        %v818 = vsel %vm817, %v815, -inf
        %819 = vmax.xlane.f32.xlu0 %v818
        %v820 = vpop.xlane.xlu0 %819
        %v821 = vsel %vm817, %v816, -inf
        %822 = vmax.xlane.f32.xlu0 %v821
        %v823 = vpop.xlane.xlu0 %822
        %v824 = vsub.f32 %v815, %v820
        %v825 = vsub.f32 %v816, %v823
        %v826 = vmul.f32 %v824, 1.442695
        %v827 = vpow.pop %v826
        %v828 = vmul.f32 %v825, 1.442695
        %v829 = vpow.pop %v828
        %v830 = vsel %vm817, %v827, 0.0
        %831 = vadd.xlane.f32.xlu0 %v830
        %v832 = vpop.xlane.xlu0 %831
        %v833 = vsel %vm817, %v829, 0.0
        %834 = vadd.xlane.f32.xlu0 %v833
        %v835 = vpop.xlane.xlu0 %834
        %v836 = vrcp.pop %v832
        %v837 = vrcp.pop %v835
        %v838 = vmul.f32 %v827, %v836
        %v839 = vmul.f32 %v829, %v837
        %v841 = vsel %vm817, %v838, 0
        %843 = vmatprep.subr.mxu0 0.0
        %844 = vmatpush1.msra.mxu0 %v637
        %845 = vmatprep.subr.mxu0 0.0
        %846 = vmatpush1.msra.mxu0 0.0
        %847 = vmatprep.subr.mxu0 0.0
        %848 = vmatpush1.msra.mxu0 0.0
        %849 = vmatprep.subr.mxu0 0.0
        %850 = vmatpush1.msra.mxu0 0.0
        %851 = vmatprep.subr.mxu0 0.0
        %852 = vmatpush1.msra.mxu0 0.0
        %853 = vmatprep.subr.mxu0 0.0
        %854 = vmatpush1.msra.mxu0 0.0
        %855 = vmatprep.subr.mxu0 0.0
        %856 = vmatpush1.msra.mxu0 0.0
        %857 = vmatprep.subr.mxu0 0.0
        %858 = vmatpush1.msra.mxu0 0.0
        %859 = vmatprep.subr.mxu0 0.0
        %860 = vmatpush1.msra.mxu0 0.0
        %861 = vmatprep.subr.mxu0 0.0
        %862 = vmatpush1.msra.mxu0 0.0
        %863 = vmatprep.subr.mxu0 0.0
        %864 = vmatpush1.msra.mxu0 0.0
        %865 = vmatprep.subr.mxu0 0.0
        %866 = vmatpush1.msra.mxu0 0.0
        %867 = vmatprep.subr.mxu0 0.0
        %868 = vmatpush1.msra.mxu0 0.0
        %869 = vmatprep.subr.mxu0 0.0
        %870 = vmatpush1.msra.mxu0 0.0
        %871 = vmatprep.subr.mxu0 0.0
        %872 = vmatpush1.msra.mxu0 0.0
        %873 = vmatprep.subr.mxu0 0.0
        %874 = vmatpush1.msra.mxu0 0.0
        %875 = vmatprep.subr.mxu0 0.0
        %876 = vmatpush1.msra.mxu0 0.0
        %877 = vmatprep.subr.mxu0 0.0
        %878 = vmatpush1.msra.mxu0 0.0
        %879 = vmatprep.subr.mxu0 0.0
        %880 = vmatpush1.msra.mxu0 0.0
        %881 = vmatprep.subr.mxu0 0.0
        %882 = vmatpush1.msra.mxu0 0.0
        %883 = vmatprep.subr.mxu0 0.0
        %884 = vmatpush1.msra.mxu0 0.0
        %885 = vmatprep.subr.mxu0 0.0
        %886 = vmatpush1.msra.mxu0 0.0
        %887 = vmatprep.subr.mxu0 0.0
        %888 = vmatpush1.msra.mxu0 0.0
        %889 = vmatprep.subr.mxu0 0.0
        %890 = vmatpush1.msra.mxu0 0.0
        %891 = vmatprep.subr.mxu0 0.0
        %892 = vmatpush1.msra.mxu0 0.0
        %893 = vmatprep.subr.mxu0 0.0
        %894 = vmatpush1.msra.mxu0 0.0
        %895 = vmatprep.subr.mxu0 0.0
        %896 = vmatpush1.msra.mxu0 0.0
        %897 = vmatprep.subr.mxu0 0.0
        %898 = vmatpush1.msra.mxu0 0.0
        %899 = vmatprep.subr.mxu0 0.0
        %900 = vmatpush1.msra.mxu0 0.0
        %901 = vmatprep.subr.mxu0 0.0
        %902 = vmatpush1.msra.mxu0 0.0
        %903 = vmatprep.subr.mxu0 0.0
        %904 = vmatpush1.msra.mxu0 0.0
        %905 = vmatprep.subr.mxu0 0.0
        %906 = vmatpush1.msra.mxu0 0.0
        %907 = vmatprep.mubr.f32.mxu0 0.0
        %908 = vmatmul.mubr.f32.gmra.mrb[0].mxu0 %v841
        %v909 = vpop.f32.mrb[0].mxu0
        %v910 = vadd.f32 0.0, %v909
        %v911 = vpop.f32.mrb[0].mxu0
        %912 = vdwg.mxu0
        %v914 = vsel %vm817, %v839, 0
        %916 = vmatprep.subr.mxu0 0.0
        %917 = vmatpush1.msra.mxu0 %v642
        %918 = vmatprep.subr.mxu0 0.0
        %919 = vmatpush1.msra.mxu0 0.0
        %920 = vmatprep.subr.mxu0 0.0
        %921 = vmatpush1.msra.mxu0 0.0
        %922 = vmatprep.subr.mxu0 0.0
        %923 = vmatpush1.msra.mxu0 0.0
        %924 = vmatprep.subr.mxu0 0.0
        %925 = vmatpush1.msra.mxu0 0.0
        %926 = vmatprep.subr.mxu0 0.0
        %927 = vmatpush1.msra.mxu0 0.0
        %928 = vmatprep.subr.mxu0 0.0
        %929 = vmatpush1.msra.mxu0 0.0
        %930 = vmatprep.subr.mxu0 0.0
        %931 = vmatpush1.msra.mxu0 0.0
        %932 = vmatprep.subr.mxu0 0.0
        %933 = vmatpush1.msra.mxu0 0.0
        %934 = vmatprep.subr.mxu0 0.0
        %935 = vmatpush1.msra.mxu0 0.0
        %936 = vmatprep.subr.mxu0 0.0
        %937 = vmatpush1.msra.mxu0 0.0
        %938 = vmatprep.subr.mxu0 0.0
        %939 = vmatpush1.msra.mxu0 0.0
        %940 = vmatprep.subr.mxu0 0.0
        %941 = vmatpush1.msra.mxu0 0.0
        %942 = vmatprep.subr.mxu0 0.0
        %943 = vmatpush1.msra.mxu0 0.0
        %944 = vmatprep.subr.mxu0 0.0
        %945 = vmatpush1.msra.mxu0 0.0
        %946 = vmatprep.subr.mxu0 0.0
        %947 = vmatpush1.msra.mxu0 0.0
        %948 = vmatprep.subr.mxu0 0.0
        %949 = vmatpush1.msra.mxu0 0.0
        %950 = vmatprep.subr.mxu0 0.0
        %951 = vmatpush1.msra.mxu0 0.0
        %952 = vmatprep.subr.mxu0 0.0
        %953 = vmatpush1.msra.mxu0 0.0
        %954 = vmatprep.subr.mxu0 0.0
        %955 = vmatpush1.msra.mxu0 0.0
        %956 = vmatprep.subr.mxu0 0.0
        %957 = vmatpush1.msra.mxu0 0.0
        %958 = vmatprep.subr.mxu0 0.0
        %959 = vmatpush1.msra.mxu0 0.0
        %960 = vmatprep.subr.mxu0 0.0
        %961 = vmatpush1.msra.mxu0 0.0
        %962 = vmatprep.subr.mxu0 0.0
        %963 = vmatpush1.msra.mxu0 0.0
        %964 = vmatprep.subr.mxu0 0.0
        %965 = vmatpush1.msra.mxu0 0.0
        %966 = vmatprep.subr.mxu0 0.0
        %967 = vmatpush1.msra.mxu0 0.0
        %968 = vmatprep.subr.mxu0 0.0
        %969 = vmatpush1.msra.mxu0 0.0
        %970 = vmatprep.subr.mxu0 0.0
        %971 = vmatpush1.msra.mxu0 0.0
        %972 = vmatprep.subr.mxu0 0.0
        %973 = vmatpush1.msra.mxu0 0.0
        %974 = vmatprep.subr.mxu0 0.0
        %975 = vmatpush1.msra.mxu0 0.0
        %976 = vmatprep.subr.mxu0 0.0
        %977 = vmatpush1.msra.mxu0 0.0
        %978 = vmatprep.subr.mxu0 0.0
        %979 = vmatpush1.msra.mxu0 0.0
        %980 = vmatprep.mubr.f32.mxu0 0.0
        %981 = vmatmul.mubr.f32.gmra.mrb[0].mxu0 %v914
        %v982 = vpop.f32.mrb[0].mxu0
        %v983 = vadd.f32 0.0, %v982
        %v984 = vpop.f32.mrb[0].mxu0
        %985 = vdwg.mxu0
        %s986 = scalar_lea.vmem [#allocation2], 96
        %v987 = vld [vmem:[%s986] sm:$0xff]
        %v988 = vld [vmem:[%s986 + $0x8] sm:$0xff]
        %v989 = vld [vmem:[%s986 + $0x10] sm:$0xff]
        %v990 = vld [vmem:[%s986 + $0x18] sm:$0xff]
        %v991 = vlaneseq
        %v992 = vshrl.u32 %v991, 7
        %v993 = vsub.s32 3, %v992
        %v994 = vrot.slane %v341, %v993
        %v996 = vsel %vm348, %v910, 0
        %v999 = vsel %vm348, %v983, 0
        %1001 = vmatprep.subr.mxu0 0.0
        %1002 = vmatpush1.msra.mxu0 %v987
        %1003 = vmatprep.subr.mxu0 0.0
        %1004 = vmatpush1.msra.mxu0 %v988
        %1005 = vmatprep.subr.mxu0 0.0
        %1006 = vmatpush1.msra.mxu0 %v989
        %1007 = vmatprep.subr.mxu0 0.0
        %1008 = vmatpush1.msra.mxu0 %v990
        %1009 = vmatprep.subr.mxu0 0.0
        %1010 = vmatpush1.msra.mxu0 0.0
        %1011 = vmatprep.subr.mxu0 0.0
        %1012 = vmatpush1.msra.mxu0 0.0
        %1013 = vmatprep.subr.mxu0 0.0
        %1014 = vmatpush1.msra.mxu0 0.0
        %1015 = vmatprep.subr.mxu0 0.0
        %1016 = vmatpush1.msra.mxu0 0.0
        %1017 = vmatprep.subr.mxu0 0.0
        %1018 = vmatpush1.msra.mxu0 0.0
        %1019 = vmatprep.subr.mxu0 0.0
        %1020 = vmatpush1.msra.mxu0 0.0
        %1021 = vmatprep.subr.mxu0 0.0
        %1022 = vmatpush1.msra.mxu0 0.0
        %1023 = vmatprep.subr.mxu0 0.0
        %1024 = vmatpush1.msra.mxu0 0.0
        %1025 = vmatprep.subr.mxu0 0.0
        %1026 = vmatpush1.msra.mxu0 0.0
        %1027 = vmatprep.subr.mxu0 0.0
        %1028 = vmatpush1.msra.mxu0 0.0
        %1029 = vmatprep.subr.mxu0 0.0
        %1030 = vmatpush1.msra.mxu0 0.0
        %1031 = vmatprep.subr.mxu0 0.0
        %1032 = vmatpush1.msra.mxu0 0.0
        %1033 = vmatprep.subr.mxu0 0.0
        %1034 = vmatpush1.msra.mxu0 0.0
        %1035 = vmatprep.subr.mxu0 0.0
        %1036 = vmatpush1.msra.mxu0 0.0
        %1037 = vmatprep.subr.mxu0 0.0
        %1038 = vmatpush1.msra.mxu0 0.0
        %1039 = vmatprep.subr.mxu0 0.0
        %1040 = vmatpush1.msra.mxu0 0.0
        %1041 = vmatprep.subr.mxu0 0.0
        %1042 = vmatpush1.msra.mxu0 0.0
        %1043 = vmatprep.subr.mxu0 0.0
        %1044 = vmatpush1.msra.mxu0 0.0
        %1045 = vmatprep.subr.mxu0 0.0
        %1046 = vmatpush1.msra.mxu0 0.0
        %1047 = vmatprep.subr.mxu0 0.0
        %1048 = vmatpush1.msra.mxu0 0.0
        %1049 = vmatprep.subr.mxu0 0.0
        %1050 = vmatpush1.msra.mxu0 0.0
        %1051 = vmatprep.subr.mxu0 0.0
        %1052 = vmatpush1.msra.mxu0 0.0
        %1053 = vmatprep.subr.mxu0 0.0
        %1054 = vmatpush1.msra.mxu0 0.0
        %1055 = vmatprep.subr.mxu0 0.0
        %1056 = vmatpush1.msra.mxu0 0.0
        %1057 = vmatprep.subr.mxu0 0.0
        %1058 = vmatpush1.msra.mxu0 0.0
        %1059 = vmatprep.subr.mxu0 0.0
        %1060 = vmatpush1.msra.mxu0 0.0
        %1061 = vmatprep.subr.mxu0 0.0
        %1062 = vmatpush1.msra.mxu0 0.0
        %1063 = vmatprep.subr.mxu0 0.0
        %1064 = vmatpush1.msra.mxu0 0.0
        %1065 = vmatprep.mubr.f32.mxu0 0.0
        %1066 = vmatmul.mubr.f32.gmra.mrb[0].mxu0 %v996
        %v1067 = vpop.f32.mrb[0].mxu0
        %v1068 = vadd.f32 %v994, %v1067
        %v1069 = vpop.f32.mrb[0].mxu0
        %1070 = vmatprep.mubr.f32.mxu0 0.0
        %1071 = vmatmul.mubr.f32.gmra.mrb[0].mxu0 %v999
        %v1072 = vpop.f32.mrb[0].mxu0
        %v1073 = vadd.f32 %v994, %v1072
        %v1074 = vpop.f32.mrb[0].mxu0
        %1075 = vdwg.mxu0
        %v1076 = vadd.f32 %v346, %v1068
        %v1077 = vadd.f32 %v347, %v1073
        %v1078 = vsel %vm348, %v1076, 0.0
        %1079 = vadd.xlane.f32.xlu0 %v1078
        %v1080 = vpop.xlane.xlu0 %1079
        %v1081 = vsel %vm348, %v1077, 0.0
        %1082 = vadd.xlane.f32.xlu0 %v1081
        %v1083 = vpop.xlane.xlu0 %1082
        %v1084 = vmul.f32 %v1080, %v355
        %v1085 = vmul.f32 %v1083, %v355
        %v1086 = vsub.f32 %v1076, %v1084
        %v1087 = vsub.f32 %v1077, %v1085
        %v1088 = vmul.f32 %v1086, %v1086
        %v1089 = vmul.f32 %v1087, %v1087
        %v1090 = vsel %vm348, %v1088, 0.0
        %1091 = vadd.xlane.f32.xlu0 %v1090
        %v1092 = vpop.xlane.xlu0 %1091
        %v1093 = vsel %vm348, %v1089, 0.0
        %1094 = vadd.xlane.f32.xlu0 %v1093
        %v1095 = vpop.xlane.xlu0 %1094
        %v1096 = vmul.f32 %v1092, %v355
        %v1097 = vmul.f32 %v1095, %v355
        %v1098 = vadd.f32 %v1096, 1e-05
        %v1099 = vadd.f32 %v1097, 1e-05
        %v1100 = vrsqrt.pop %v1098
        %v1101 = vrsqrt.pop %v1099
        %v1102 = vmul.f32 %v1086, %v1100
        %v1103 = vmul.f32 %v1087, %v1101
        %v1104 = vlaneseq
        %v1105 = vshrl.u32 %v1104, 7
        %v1106 = vsub.s32 7, %v1105
        %v1107 = vrot.slane %v341, %v1106
        %v1108 = vmul.f32 %v1102, %v1107
        %v1109 = vmul.f32 %v1103, %v1107
        %v1110 = vlaneseq
        %v1111 = vshrl.u32 %v1110, 7
        %v1112 = vsub.s32 0, %v1111
        %v1113 = vrot.slane %v342, %v1112
        %v1114 = vadd.f32 %v1108, %v1113
        %v1115 = vadd.f32 %v1109, %v1113
        %v1116 = vld [vmem:[%s4] sm:$0xff]
        %v1117 = vld [vmem:[%s4 + $0x8] sm:$0xff]
        %v1118 = vld [vmem:[%s4 + $0x10] sm:$0xff]
        %v1119 = vld [vmem:[%s4 + $0x18] sm:$0xff]
        %v1120 = vld [vmem:[%s7] sm:$0x1]
        %v1122 = vlaneseq
        %v1123 = vshrl.u32 %v1122, 7
        %v1124 = vsub.s32 0, %v1123
        %v1125 = vrot.slane %v1120, %v1124
        %v1128 = vsel %vm348, %v1114, 0
        %v1131 = vsel %vm348, %v1115, 0
        %1133 = vmatprep.subr.mxu0 0.0
        %1134 = vmatpush1.msra.mxu0 %v1116
        %1135 = vmatprep.subr.mxu0 0.0
        %1136 = vmatpush1.msra.mxu0 %v1117
        %1137 = vmatprep.subr.mxu0 0.0
        %1138 = vmatpush1.msra.mxu0 %v1118
        %1139 = vmatprep.subr.mxu0 0.0
        %1140 = vmatpush1.msra.mxu0 %v1119
        %1141 = vmatprep.subr.mxu0 0.0
        %1142 = vmatpush1.msra.mxu0 0.0
        %1143 = vmatprep.subr.mxu0 0.0
        %1144 = vmatpush1.msra.mxu0 0.0
        %1145 = vmatprep.subr.mxu0 0.0
        %1146 = vmatpush1.msra.mxu0 0.0
        %1147 = vmatprep.subr.mxu0 0.0
        %1148 = vmatpush1.msra.mxu0 0.0
        %1149 = vmatprep.subr.mxu0 0.0
        %1150 = vmatpush1.msra.mxu0 0.0
        %1151 = vmatprep.subr.mxu0 0.0
        %1152 = vmatpush1.msra.mxu0 0.0
        %1153 = vmatprep.subr.mxu0 0.0
        %1154 = vmatpush1.msra.mxu0 0.0
        %1155 = vmatprep.subr.mxu0 0.0
        %1156 = vmatpush1.msra.mxu0 0.0
        %1157 = vmatprep.subr.mxu0 0.0
        %1158 = vmatpush1.msra.mxu0 0.0
        %1159 = vmatprep.subr.mxu0 0.0
        %1160 = vmatpush1.msra.mxu0 0.0
        %1161 = vmatprep.subr.mxu0 0.0
        %1162 = vmatpush1.msra.mxu0 0.0
        %1163 = vmatprep.subr.mxu0 0.0
        %1164 = vmatpush1.msra.mxu0 0.0
        %1165 = vmatprep.subr.mxu0 0.0
        %1166 = vmatpush1.msra.mxu0 0.0
        %1167 = vmatprep.subr.mxu0 0.0
        %1168 = vmatpush1.msra.mxu0 0.0
        %1169 = vmatprep.subr.mxu0 0.0
        %1170 = vmatpush1.msra.mxu0 0.0
        %1171 = vmatprep.subr.mxu0 0.0
        %1172 = vmatpush1.msra.mxu0 0.0
        %1173 = vmatprep.subr.mxu0 0.0
        %1174 = vmatpush1.msra.mxu0 0.0
        %1175 = vmatprep.subr.mxu0 0.0
        %1176 = vmatpush1.msra.mxu0 0.0
        %1177 = vmatprep.subr.mxu0 0.0
        %1178 = vmatpush1.msra.mxu0 0.0
        %1179 = vmatprep.subr.mxu0 0.0
        %1180 = vmatpush1.msra.mxu0 0.0
        %1181 = vmatprep.subr.mxu0 0.0
        %1182 = vmatpush1.msra.mxu0 0.0
        %1183 = vmatprep.subr.mxu0 0.0
        %1184 = vmatpush1.msra.mxu0 0.0
        %1185 = vmatprep.subr.mxu0 0.0
        %1186 = vmatpush1.msra.mxu0 0.0
        %1187 = vmatprep.subr.mxu0 0.0
        %1188 = vmatpush1.msra.mxu0 0.0
        %1189 = vmatprep.subr.mxu0 0.0
        %1190 = vmatpush1.msra.mxu0 0.0
        %1191 = vmatprep.subr.mxu0 0.0
        %1192 = vmatpush1.msra.mxu0 0.0
        %1193 = vmatprep.subr.mxu0 0.0
        %1194 = vmatpush1.msra.mxu0 0.0
        %1195 = vmatprep.subr.mxu0 0.0
        %1196 = vmatpush1.msra.mxu0 0.0
        %1197 = vmatprep.mubr.f32.mxu0 0.0
        %1198 = vmatmul.mubr.f32.gmra.mrb[0].mxu0 %v1128
        %v1199 = vpop.f32.mrb[0].mxu0
        %v1200 = vadd.f32 %v1125, %v1199
        %v1201 = vpop.f32.mrb[0].mxu0
        %1202 = vmatprep.mubr.f32.mxu0 0.0
        %1203 = vmatmul.mubr.f32.gmra.mrb[0].mxu0 %v1131
        %v1204 = vpop.f32.mrb[0].mxu0
        %v1205 = vadd.f32 %v1125, %v1204
        %v1206 = vpop.f32.mrb[0].mxu0
        %1207 = vdwg.mxu0
        %v1208 = vmax.f32 %v1200, 0.0
        %v1209 = vmax.f32 %v1205, 0.0
        %v1210 = vld [vmem:[%s5] sm:$0xff]
        %v1211 = vld [vmem:[%s5 + $0x8] sm:$0xff]
        %v1212 = vld [vmem:[%s5 + $0x10] sm:$0xff]
        %v1213 = vld [vmem:[%s5 + $0x18] sm:$0xff]
        %v1214 = vld [vmem:[%s5 + $0x20] sm:$0xff]
        %v1215 = vld [vmem:[%s5 + $0x28] sm:$0xff]
        %v1216 = vld [vmem:[%s5 + $0x30] sm:$0xff]
        %v1217 = vld [vmem:[%s5 + $0x38] sm:$0xff]
        %v1218 = vlaneseq
        %v1219 = vshrl.u32 %v1218, 7
        %v1220 = vsub.s32 4, %v1219
        %v1221 = vrot.slane %v341, %v1220
        %vm1222 = vcmask 523264
        %v1224 = vsel %vm1222, %v1208, 0
        %v1227 = vsel %vm1222, %v1209, 0
        %1229 = vmatprep.subr.mxu0 0.0
        %1230 = vmatpush1.msra.mxu0 %v1210
        %1231 = vmatprep.subr.mxu0 0.0
        %1232 = vmatpush1.msra.mxu0 %v1211
        %1233 = vmatprep.subr.mxu0 0.0
        %1234 = vmatpush1.msra.mxu0 %v1212
        %1235 = vmatprep.subr.mxu0 0.0
        %1236 = vmatpush1.msra.mxu0 %v1213
        %1237 = vmatprep.subr.mxu0 0.0
        %1238 = vmatpush1.msra.mxu0 %v1214
        %1239 = vmatprep.subr.mxu0 0.0
        %1240 = vmatpush1.msra.mxu0 %v1215
        %1241 = vmatprep.subr.mxu0 0.0
        %1242 = vmatpush1.msra.mxu0 %v1216
        %1243 = vmatprep.subr.mxu0 0.0
        %1244 = vmatpush1.msra.mxu0 %v1217
        %1245 = vmatprep.subr.mxu0 0.0
        %1246 = vmatpush1.msra.mxu0 0.0
        %1247 = vmatprep.subr.mxu0 0.0
        %1248 = vmatpush1.msra.mxu0 0.0
        %1249 = vmatprep.subr.mxu0 0.0
        %1250 = vmatpush1.msra.mxu0 0.0
        %1251 = vmatprep.subr.mxu0 0.0
        %1252 = vmatpush1.msra.mxu0 0.0
        %1253 = vmatprep.subr.mxu0 0.0
        %1254 = vmatpush1.msra.mxu0 0.0
        %1255 = vmatprep.subr.mxu0 0.0
        %1256 = vmatpush1.msra.mxu0 0.0
        %1257 = vmatprep.subr.mxu0 0.0
        %1258 = vmatpush1.msra.mxu0 0.0
        %1259 = vmatprep.subr.mxu0 0.0
        %1260 = vmatpush1.msra.mxu0 0.0
        %1261 = vmatprep.subr.mxu0 0.0
        %1262 = vmatpush1.msra.mxu0 0.0
        %1263 = vmatprep.subr.mxu0 0.0
        %1264 = vmatpush1.msra.mxu0 0.0
        %1265 = vmatprep.subr.mxu0 0.0
        %1266 = vmatpush1.msra.mxu0 0.0
        %1267 = vmatprep.subr.mxu0 0.0
        %1268 = vmatpush1.msra.mxu0 0.0
        %1269 = vmatprep.subr.mxu0 0.0
        %1270 = vmatpush1.msra.mxu0 0.0
        %1271 = vmatprep.subr.mxu0 0.0
        %1272 = vmatpush1.msra.mxu0 0.0
        %1273 = vmatprep.subr.mxu0 0.0
        %1274 = vmatpush1.msra.mxu0 0.0
        %1275 = vmatprep.subr.mxu0 0.0
        %1276 = vmatpush1.msra.mxu0 0.0
        %1277 = vmatprep.subr.mxu0 0.0
        %1278 = vmatpush1.msra.mxu0 0.0
        %1279 = vmatprep.subr.mxu0 0.0
        %1280 = vmatpush1.msra.mxu0 0.0
        %1281 = vmatprep.subr.mxu0 0.0
        %1282 = vmatpush1.msra.mxu0 0.0
        %1283 = vmatprep.subr.mxu0 0.0
        %1284 = vmatpush1.msra.mxu0 0.0
        %1285 = vmatprep.subr.mxu0 0.0
        %1286 = vmatpush1.msra.mxu0 0.0
        %1287 = vmatprep.subr.mxu0 0.0
        %1288 = vmatpush1.msra.mxu0 0.0
        %1289 = vmatprep.subr.mxu0 0.0
        %1290 = vmatpush1.msra.mxu0 0.0
        %1291 = vmatprep.subr.mxu0 0.0
        %1292 = vmatpush1.msra.mxu0 0.0
        %1293 = vmatprep.mubr.f32.mxu0 0.0
        %1294 = vmatmul.mubr.f32.gmra.mrb[0].mxu0 %v1224
        %v1295 = vpop.f32.mrb[0].mxu0
        %v1296 = vadd.f32 %v1221, %v1295
        %v1297 = vpop.f32.mrb[0].mxu0
        %1298 = vmatprep.mubr.f32.mxu0 0.0
        %1299 = vmatmul.mubr.f32.gmra.mrb[0].mxu0 %v1227
        %v1300 = vpop.f32.mrb[0].mxu0
        %v1301 = vadd.f32 %v1221, %v1300
        %v1302 = vpop.f32.mrb[0].mxu0
        %1303 = vdwg.mxu0
        %v1304 = vadd.f32 %v1076, %v1296
        %v1305 = vadd.f32 %v1077, %v1301
        %v1306 = vsel %vm348, %v1304, 0.0
        %1307 = vadd.xlane.f32.xlu0 %v1306
        %v1308 = vpop.xlane.xlu0 %1307
        %v1309 = vsel %vm348, %v1305, 0.0
        %1310 = vadd.xlane.f32.xlu0 %v1309
        %v1311 = vpop.xlane.xlu0 %1310
        %v1312 = vmul.f32 %v1308, %v355
        %v1313 = vmul.f32 %v1311, %v355
        %v1314 = vsub.f32 %v1304, %v1312
        %v1315 = vsub.f32 %v1305, %v1313
        %v1316 = vmul.f32 %v1314, %v1314
        %v1317 = vmul.f32 %v1315, %v1315
        %v1318 = vsel %vm348, %v1316, 0.0
        %1319 = vadd.xlane.f32.xlu0 %v1318
        %v1320 = vpop.xlane.xlu0 %1319
        %v1321 = vsel %vm348, %v1317, 0.0
        %1322 = vadd.xlane.f32.xlu0 %v1321
        %v1323 = vpop.xlane.xlu0 %1322
        %v1324 = vmul.f32 %v1320, %v355
        %v1325 = vmul.f32 %v1323, %v355
        %v1326 = vadd.f32 %v1324, 1e-05
        %v1327 = vadd.f32 %v1325, 1e-05
        %v1328 = vrsqrt.pop %v1326
        %v1329 = vrsqrt.pop %v1327
        %v1330 = vmul.f32 %v1314, %v1328
        %v1331 = vmul.f32 %v1315, %v1329
        %v1332 = vlaneseq
        %v1333 = vshrl.u32 %v1332, 7
        %v1334 = vsub.s32 1, %v1333
        %v1335 = vrot.slane %v342, %v1334
        %v1336 = vmul.f32 %v1330, %v1335
        %v1337 = vmul.f32 %v1331, %v1335
        %v1338 = vlaneseq
        %v1339 = vshrl.u32 %v1338, 7
        %v1340 = vsub.s32 2, %v1339
        %v1341 = vrot.slane %v342, %v1340
        %v1342 = vadd.f32 %v1336, %v1341
        %v1343 = vadd.f32 %v1337, %v1341
        %1344 = vst.msk [vmem:[%s328] sm:$0xff] %vm348, %v1342
        %1345 = vst.msk [vmem:[%s328 + $0x8] sm:$0xff] %vm348, %v1343
        %s1346 = sand.u32 %s209, 1
        %s1347 = scalar_lea.sflag [#allocation4], %s1346
        %s1348 = sand.u32 %s209, 1
        %s1349 = smul.addr %s1348, 16
        %s1350 = scalar_lea.vmem [#allocation5], %s1349
        // Predicated region
        $region57: #{tpu_custom_call.1} parent=51 // pred_check
          %p1351 = pneg %p219
        $region58: #{tpu_custom_call.1} parent=51 // pred_check_branch
          %1353 = sbr.rel (%p1351) target = $region60
        $region59: #{tpu_custom_call.1} parent=51 // pred_region
          %s1354 = smul.u32 2, %s23
          %s1356 = ssub.s32 256, 256
          %1357 = vsyncadd %s1347, %s1356
          %s1358 = smul.addr %s1354, 128
          %s1359 = scalar_lea.hbm %s8, %s1358
          %s1360 = sshll.u32 %s1350, 4
          %s1361 = int_to_ptr.vmem [resolvable:$true] %s1360
          %1366 = dma.vmem_to_hbm [thread:$0]  %s1361, 256, %s1359, %s1347, 128, 128, 8
        $region60: #{tpu_custom_call.1} parent=51 // pred_fallthru
          _
      $region52: #{tpu_custom_call.1} parent=5 // pred_fallthru
        _
      %p1367 = scmp.le.s32.totalorder 2, %s18
      // Predicated region
      $region61: #{tpu_custom_call.1} parent=5 // pred_check
        %p1368 = pneg %p1367
      $region62: #{tpu_custom_call.1} parent=5 // pred_check_branch
        %1370 = sbr.rel (%p1368) target = $region64
      $region63: #{tpu_custom_call.1} parent=5 // pred_region
        %s1371 = ssub.s32 %s18, 2
        // Predicated region
        $region65: #{tpu_custom_call.1} parent=63 // pred_check
          %p1372 = pneg %p225
        $region66: #{tpu_custom_call.1} parent=63 // pred_check_branch
          %1374 = sbr.rel (%p1372) target = $region68
        $region67: #{tpu_custom_call.1} parent=63 // pred_region
          %s1375 = sand.u32 %s210, 1
          %s1376 = scalar_lea.sflag [#allocation4], %s1375
          %s1377 = sand.u32 %s210, 1
          %s1378 = smul.addr %s1377, 16
          %s1379 = scalar_lea.vmem [#allocation5], %s1378
          %1380 = dma.done %s1376, 256
        $region68: #{tpu_custom_call.1} parent=63 // pred_fallthru
          _
      $region64: #{tpu_custom_call.1} parent=5 // pred_fallthru
        _
    $region6: #{tpu_custom_call.1} parent=1 // loop_footer
      %s22 = sadd.s32 1, %s18
    $region7: #{tpu_custom_call.1} parent=1 // loop_footer_branch
      %17 = sbr.rel target = $region3
    $region8: #{tpu_custom_call.1} parent=1 // loop_exit
      _
    %1381 = vsyncpa [#allocation3], 1
    %s1382 = scalar_lea.sflag [#allocation3], 1
    %1383 = vsyncpa %s1382, 1
    %1384 = vsyncpa [#allocation4], 1
    %s1385 = scalar_lea.sflag [#allocation4], 1
    %1386 = vsyncpa %s1385, 1

</llo_original>
